<compile_context>
chip_gen: v6e
topology: v6e:2x2x1
jax: 0.10.0
libtpu: 0.0.40
codegen_flags: <defaults>
</compile_context>

<pallas_src>
import functools
import math

import jax
import jax.numpy as jnp
from jax.experimental import pallas as pl
from jax.experimental.pallas import tpu as pltpu

_LOG2PI = math.log(2.0 * math.pi)
_LANE = 128
_SUBLANE = 8


def _recip(x):
    # EUP approximate reciprocal + one Newton step (accuracy of the
    # Mahalanobis term; see header comment).
    r = pl.reciprocal(x, approx=True)
    return r * (2.0 - x * r)


def _prod_sublanes(x, n):
    """Product over axis 0 (sublanes) of an (n, TB) array -> (1, TB) or None.

    Power-of-two n: log2(n) sublane rolls (XLU) + multiplies form a pairwise
    product tree; every sublane then holds the full product and one max-reduce
    extracts it.  Returns None for other n (caller falls back to sum-of-logs).
    """
    if n == 1:
        return x
    if (n & (n - 1)) == 0:
        p = x
        s = 1
        while s < n:
            p = p * pltpu.roll(p, s, axis=0)
            s *= 2
        return jnp.max(p, axis=0, keepdims=True)
    return None


def _mdn_kernel(w_ref, mu_ref, d_ref, v_ref, y_ref, nll_ref, reg_ref,
                *, B, K, Dv, R):
    f32 = jnp.float32
    tb = y_ref.shape[-1]                         # lanes per tile (multiple of 128)

    y = y_ref[...].astype(f32)                   # (Dv, TB)

    comp_lp = []                                 # K x (1, TB) component log probs
    wlist = []                                   # K x (1, TB) unnormalized weights
    reg_row = jnp.zeros((1, tb), f32)            # per-lane sum of |off-diag prec|

    for k in range(K):                           # K is small & static: unroll
        Dg = d_ref[k].astype(f32)                # (Dv, TB)  cov_diag
        mu = mu_ref[k].astype(f32)               # (Dv, TB)
        dinv = _recip(Dg)                        # (Dv, TB)  D^{-1}
        diff = y - mu
        maha0 = jnp.sum(diff * diff * dinv, axis=0, keepdims=True)       # (1, TB)

        # ---- u = V^T D^{-1} diff  and  capacitance C = I_R + V^T D^{-1} V ----
        Vk, Wk, u = [], [], []
        for r in range(R):
            v = v_ref[k, r].astype(f32)          # (Dv, TB), read at point of use
            w_ = v * dinv                        # D^{-1} V_r
            Vk.append(v)
            Wk.append(w_)
            u.append(jnp.sum(w_ * diff, axis=0, keepdims=True))          # (1, TB)

        Cap = [[None] * R for _ in range(R)]
        for j in range(R):
            for l in range(j + 1):
                c = jnp.sum(Wk[j] * Vk[l], axis=0, keepdims=True)
                if j == l:
                    c = c + 1.0
                Cap[j][l] = c

        # ---- Cholesky of C (rank unrolled, divide/sqrt-free, rsqrt only) ----
        L = [[None] * R for _ in range(R)]
        invd = [None] * R
        detC = None
        for j in range(R):
            for l in range(j):
                s = Cap[j][l]
                for m in range(l):
                    s = s - L[j][m] * L[l][m]
                L[j][l] = s * invd[l]
            s = Cap[j][j]
            for m in range(j):
                s = s - L[j][m] * L[j][m]
            invd[j] = jax.lax.rsqrt(s)           # plain HW rsqrt (pivots O(1))
            detC = s if detC is None else detC * s

        # ---- forward substitution  L t = u ;  Woodbury Mahalanobis ----
        t = []
        for j in range(R):
            s = u[j]
            for m in range(j):
                s = s - L[j][m] * t[m]
            t.append(s * invd[j])
        maha = maha0
        for j in range(R):
            maha = maha - t[j] * t[j]

        # ---- log|cov| = log(prod(D) * det(C)) : one EUP log per component ----
        prodD = _prod_sublanes(Dg, Dv)
        if prodD is not None:
            logdet = jnp.log(prodD * detC)
        else:                                    # non power-of-two Dv fallback
            logdet = jnp.sum(jnp.log(Dg), axis=0, keepdims=True) + jnp.log(detC)

        comp_lp.append(-0.5 * (Dv * _LOG2PI + logdet + maha))            # (1, TB)
        wlist.append(w_ref[k].astype(f32))                               # (1, TB)

        # ---- sparsity reg: off-diag precision = -(A^T A)_{ij},
        #      A = L^{-1} V^T D^{-1}.  Shift s and Dv-s give transposed
        #      (equal |.|) entries, so only shifts 1..Dv//2 are computed. ----
        A = []
        for j in range(R):
            s = Wk[j]
            for m in range(j):
                s = s - L[j][m] * A[m]
            A.append(s * invd[j])                # (Dv, TB)

        for sh in range(1, Dv // 2 + 1):
            g = A[0] * pltpu.roll(A[0], sh, axis=0)
            for r in range(1, R):
                g = g + A[r] * pltpu.roll(A[r], sh, axis=0)
            contrib = jnp.sum(jnp.abs(g), axis=0, keepdims=True)         # (1, TB)
            if not (Dv % 2 == 0 and sh == Dv // 2):
                contrib = contrib + contrib      # symmetric pair counted twice
            reg_row = reg_row + contrib

    # ---- mixture log prob: logsumexp over K components (per batch lane) ----
    m = comp_lp[0]
    for k in range(1, K):
        m = jnp.maximum(m, comp_lp[k])
    den = wlist[0] * jnp.exp(comp_lp[0] - m)
    wsum = wlist[0]
    for k in range(1, K):
        den = den + wlist[k] * jnp.exp(comp_lp[k] - m)
        wsum = wsum + wlist[k]
    mix_lp = m + jnp.log(den) - jnp.log(wsum)                            # (1, TB)

    # ---- mask ragged batch lanes, reduce to per-tile partial sums ----
    lane = jax.lax.broadcasted_iota(jnp.int32, (1, tb), 1)
    valid = (pl.program_id(0) * tb + lane) < B                           # (1, TB)
    nll_tile = jnp.sum(jnp.where(valid, mix_lp, 0.0), axis=1, keepdims=True)
    reg_tile = jnp.sum(jnp.where(valid, reg_row, 0.0), axis=1, keepdims=True)

    # lane-dense (8,128) stores of the per-tile partials (scalar at [0,0])
    row_i = jax.lax.broadcasted_iota(jnp.int32, (_SUBLANE, _LANE), 0)
    col_i = jax.lax.broadcasted_iota(jnp.int32, (_SUBLANE, _LANE), 1)
    first = (row_i == 0) & (col_i == 0)
    nll_ref[...] = jnp.where(first, nll_tile, 0.0).reshape(1, _SUBLANE, _LANE)
    reg_ref[...] = jnp.where(first, reg_tile, 0.0).reshape(1, _SUBLANE, _LANE)


def lowrank_mdn_loss(features, y, *, n_components, n_vars, n_rank,
                     pred_len=12, reg_coef=0.1, max_tile_b=512):
    """JAX/Pallas equivalent of LowRankMDNhead.forward -> (loss, nll, reg)."""
    w = features['w']      # (B, K, 1)
    mu = features['mu']    # (B, K, Dv)
    D = features['D']      # (B, K, Dv)
    V = features['V']      # (B, K, Dv, R)
    B = w.shape[0]
    K, Dv, R = n_components, n_vars, n_rank
    f32 = jnp.float32

    # Lane-major layout: batch on lanes, Dv on sublanes, K/R as leading dims.
    # Inputs stay in the producer's dtype (cast to f32 in-kernel, after the
    # DMA); the ragged last tile is handled by the in-kernel lane mask, so no
    # jnp.pad copies either.
    # TODO(synk): the lane-major transpose itself is still one XLA copy pass per
    # input; fusing it into the pallas_call DMA would need a manual gather-style
    # pipeline.
    w_t = jnp.transpose(w, (1, 2, 0))                    # (K, 1, B)
    mu_t = jnp.transpose(mu, (1, 2, 0))                  # (K, Dv, B)
    d_t = jnp.transpose(D, (1, 2, 0))                    # (K, Dv, B)
    v_t = jnp.transpose(V, (1, 3, 2, 0))                 # (K, R, Dv, B)
    y_t = jnp.transpose(y[:, :, pred_len - 1], (1, 0))   # (Dv, B)

    # ---- batch tile (lane axis) from a VMEM budget ----
    in_itemsize = max(a.dtype.itemsize for a in (w_t, mu_t, d_t, v_t, y_t))
    per_lane_in = (K * (1 + 2 * Dv + R * Dv) + Dv) * in_itemsize   # one input copy
    per_lane_tmp = (6 * Dv + 24) * 4                               # live f32 temps (per k)
    budget = 24 * 1024 * 1024                                      # fits all generations
    tb = budget // (2 * per_lane_in + per_lane_tmp)                # 2x: double-buffered DMA
    tb = min(tb, max_tile_b, pl.cdiv(B, _LANE) * _LANE)
    if B >= 2 * _LANE:
        # v7x: keep >=2 grid tiles so "parallel" can shard across both TCs.
        tb = min(tb, pl.cdiv(pl.cdiv(B, 2), _LANE) * _LANE)
    tb = max(_LANE, (tb // _LANE) * _LANE)
    num_tiles = pl.cdiv(B, tb)

    kernel = functools.partial(_mdn_kernel, B=B, K=K, Dv=Dv, R=R)
    out_shape = (jax.ShapeDtypeStruct((num_tiles, _SUBLANE, _LANE), f32),
                 jax.ShapeDtypeStruct((num_tiles, _SUBLANE, _LANE), f32))

    nll_parts, reg_parts = pl.pallas_call(
        kernel,
        out_shape=out_shape,
        grid=(num_tiles,),
        in_specs=[
            pl.BlockSpec((K, 1, tb), lambda i: (0, 0, i)),           # w
            pl.BlockSpec((K, Dv, tb), lambda i: (0, 0, i)),          # mu
            pl.BlockSpec((K, Dv, tb), lambda i: (0, 0, i)),          # D
            pl.BlockSpec((K, R, Dv, tb), lambda i: (0, 0, 0, i)),    # V
            pl.BlockSpec((Dv, tb), lambda i: (0, i)),                # y (no K copy)
        ],
        out_specs=(
            pl.BlockSpec((1, _SUBLANE, _LANE), lambda i: (i, 0, 0)),
            pl.BlockSpec((1, _SUBLANE, _LANE), lambda i: (i, 0, 0)),
        ),
        compiler_params=pltpu.CompilerParams(
            dimension_semantics=("parallel",),
            vmem_limit_bytes=32 * 1024 * 1024),
    )(w_t, mu_t, d_t, v_t, y_t)

    # tiny final reductions in XLA (per-tile partials, independent grid steps)
    nll = -jnp.sum(nll_parts) / B
    reg = jnp.sum(reg_parts) / float(B * K * Dv * max(Dv - 1, 1))
    loss = nll + reg_coef * reg
    return loss, nll, reg


def reference_loss(features, y, *, n_components, n_vars, n_rank,
                   pred_len=12, reg_coef=0.1):
    """Pure-JAX dense reference (for correctness check only)."""
    w = features['w'][..., 0].astype(jnp.float32)          # (B, K)
    mu = features['mu'].astype(jnp.float32)
    D = features['D'].astype(jnp.float32)
    V = features['V'].astype(jnp.float32)
    B, K, d = mu.shape
    yl = y[:, :, pred_len - 1].astype(jnp.float32)         # (B, d)

    cov = jnp.einsum('bkir,bkjr->bkij', V, V) + jnp.einsum('bki,ij->bkij', D, jnp.eye(d))
    diff = yl[:, None, :] - mu                              # (B, K, d)
    sol = jnp.linalg.solve(cov, diff[..., None])[..., 0]
    maha = jnp.sum(diff * sol, axis=-1)
    _, logdet = jnp.linalg.slogdet(cov)
    comp_lp = -0.5 * (d * jnp.log(2 * jnp.pi) + logdet + maha)
    log_mix = jnp.log(w) - jnp.log(jnp.sum(w, axis=-1, keepdims=True))
    s = comp_lp + log_mix
    m = jnp.max(s, axis=-1, keepdims=True)
    mix_lp = (m + jnp.log(jnp.sum(jnp.exp(s - m), axis=-1, keepdims=True)))[..., 0]
    nll = -jnp.mean(mix_lp)

    prec = jnp.linalg.inv(cov)
    mask = 1.0 - jnp.eye(d)
    reg = jnp.sum(jnp.abs(prec) * mask) / (B * K * d * (d - 1))
    return nll + reg_coef * reg, nll, reg


if __name__ == "__main__":
    B, K, Dv, R, PRED = 2, 4, 8, 2, 12  # batch, n_components, n_vars, n_rank, pred_len
    key = jax.random.PRNGKey(0)
    k1, k2, k3, k4, k5 = jax.random.split(key, 5)
    features = {
        'w': jax.random.uniform(k1, (B, K, 1), minval=0.2, maxval=1.0, dtype=jnp.float32),
        'mu': jax.random.normal(k2, (B, K, Dv), dtype=jnp.float32),
        'D': jax.random.uniform(k3, (B, K, Dv), minval=0.5, maxval=1.5, dtype=jnp.float32),
        'V': 0.3 * jax.random.normal(k4, (B, K, Dv, R), dtype=jnp.float32),
    }
    y = jax.random.normal(k5, (B, Dv, PRED), dtype=jnp.float32)

    loss, nll, reg = lowrank_mdn_loss(features, y, n_components=K, n_vars=Dv,
                                      n_rank=R, pred_len=PRED, reg_coef=0.1)
    jax.block_until_ready(loss)

    # mirror PyTorch's return of (loss, nll.item(), reg.item())
    result = (loss, float(nll), float(reg))

    ref_loss, ref_nll, ref_reg = reference_loss(features, y, n_components=K,
                                                n_vars=Dv, n_rank=R,
                                                pred_len=PRED, reg_coef=0.1)
    for got, want in ((loss, ref_loss), (nll, ref_nll), (reg, ref_reg)):
        g, wv = float(got), float(want)
        assert abs(g - wv) <= 2e-3 + 2e-3 * abs(wv), (g, wv)

    # TODO(synk): .sample() path (Dist.sample) is host/RNG-driven and not part of
    # the forward loss; it is intentionally not implemented in the kernel.
    print("KERNEL_OK")
</pallas_src>

<mosaic_0001>
module attributes {stable_mosaic.version = 11 : i64} {
  func.func @_mdn_kernel(%arg0: i32, %arg1: memref<4x1x128xf32, #tpu.memory_space<vmem>>, %arg2: memref<4x8x128xf32, #tpu.memory_space<vmem>>, %arg3: memref<4x8x128xf32, #tpu.memory_space<vmem>>, %arg4: memref<4x2x8x128xf32, #tpu.memory_space<vmem>>, %arg5: memref<8x128xf32, #tpu.memory_space<vmem>>, %arg6: memref<1x8x128xf32, #tpu.memory_space<vmem>>, %arg7: memref<1x8x128xf32, #tpu.memory_space<vmem>>) attributes {dimension_semantics = [#tpu.dimension_semantics<parallel>], iteration_bounds = array<i64: 1>, scalar_prefetch = 0 : i64, scratch_operands = 0 : i64, tpu.core_type = #tpu.core_type<tc>, window_params = [{transform_indices = @transform_0, window_bounds = array<i64: 4, 1, 128>}, {transform_indices = @transform_1, window_bounds = array<i64: 4, 8, 128>}, {transform_indices = @transform_2, window_bounds = array<i64: 4, 8, 128>}, {transform_indices = @transform_3, window_bounds = array<i64: 4, 2, 8, 128>}, {transform_indices = @transform_4, window_bounds = array<i64: 8, 128>}, {transform_indices = @transform_5, window_bounds = array<i64: 1, 8, 128>}, {transform_indices = @transform_6, window_bounds = array<i64: 1, 8, 128>}]} {
    %c0 = arith.constant 0 : index
    %c0_0 = arith.constant 0 : index
    %0 = vector.load %arg5[%c0, %c0_0] : memref<8x128xf32, #tpu.memory_space<vmem>>, vector<8x128xf32>
    %cst = arith.constant 0.000000e+00 : f32
    %1 = vector.broadcast %cst : f32 to vector<1x128xf32>
    %c0_1 = arith.constant 0 : index
    %c0_2 = arith.constant 0 : index
    %c0_3 = arith.constant 0 : index
    %2 = vector.load %arg3[%c0_1, %c0_2, %c0_3] : memref<4x8x128xf32, #tpu.memory_space<vmem>>, vector<1x8x128xf32>
    %3 = vector.shape_cast %2 : vector<1x8x128xf32> to vector<8x128xf32>
    %c0_4 = arith.constant 0 : index
    %c0_5 = arith.constant 0 : index
    %c0_6 = arith.constant 0 : index
    %4 = vector.load %arg2[%c0_4, %c0_5, %c0_6] : memref<4x8x128xf32, #tpu.memory_space<vmem>>, vector<1x8x128xf32>
    %5 = vector.shape_cast %4 : vector<1x8x128xf32> to vector<8x128xf32>
    %6 = tpu.reciprocal %3 {approx = true} : vector<8x128xf32> -> vector<8x128xf32>
    %7 = arith.mulf %3, %6 : vector<8x128xf32>
    %cst_7 = arith.constant 2.000000e+00 : f32
    %8 = vector.broadcast %cst_7 : f32 to vector<8x128xf32>
    %9 = arith.subf %8, %7 : vector<8x128xf32>
    %10 = arith.mulf %6, %9 : vector<8x128xf32>
    %11 = arith.subf %0, %5 : vector<8x128xf32>
    %12 = arith.mulf %11, %11 : vector<8x128xf32>
    %13 = arith.mulf %12, %10 : vector<8x128xf32>
    %cst_8 = arith.constant dense<0.000000e+00> : vector<128xf32>
    %14 = vector.multi_reduction <add>, %13, %cst_8 [0] : vector<8x128xf32> to vector<128xf32>
    %15 = vector.shape_cast %14 : vector<128xf32> to vector<1x128xf32>
    %c0_9 = arith.constant 0 : index
    %c0_10 = arith.constant 0 : index
    %c0_11 = arith.constant 0 : index
    %c0_12 = arith.constant 0 : index
    %16 = vector.load %arg4[%c0_9, %c0_10, %c0_11, %c0_12] : memref<4x2x8x128xf32, #tpu.memory_space<vmem>>, vector<1x1x8x128xf32>
    %17 = vector.shape_cast %16 : vector<1x1x8x128xf32> to vector<8x128xf32>
    %18 = arith.mulf %17, %10 : vector<8x128xf32>
    %19 = arith.mulf %18, %11 : vector<8x128xf32>
    %cst_13 = arith.constant dense<0.000000e+00> : vector<128xf32>
    %20 = vector.multi_reduction <add>, %19, %cst_13 [0] : vector<8x128xf32> to vector<128xf32>
    %21 = vector.shape_cast %20 : vector<128xf32> to vector<1x128xf32>
    %c0_14 = arith.constant 0 : index
    %c1 = arith.constant 1 : index
    %c0_15 = arith.constant 0 : index
    %c0_16 = arith.constant 0 : index
    %22 = vector.load %arg4[%c0_14, %c1, %c0_15, %c0_16] : memref<4x2x8x128xf32, #tpu.memory_space<vmem>>, vector<1x1x8x128xf32>
    %23 = vector.shape_cast %22 : vector<1x1x8x128xf32> to vector<8x128xf32>
    %24 = arith.mulf %23, %10 : vector<8x128xf32>
    %25 = arith.mulf %24, %11 : vector<8x128xf32>
    %cst_17 = arith.constant dense<0.000000e+00> : vector<128xf32>
    %26 = vector.multi_reduction <add>, %25, %cst_17 [0] : vector<8x128xf32> to vector<128xf32>
    %27 = vector.shape_cast %26 : vector<128xf32> to vector<1x128xf32>
    %28 = arith.mulf %18, %17 : vector<8x128xf32>
    %cst_18 = arith.constant dense<0.000000e+00> : vector<128xf32>
    %29 = vector.multi_reduction <add>, %28, %cst_18 [0] : vector<8x128xf32> to vector<128xf32>
    %30 = vector.shape_cast %29 : vector<128xf32> to vector<1x128xf32>
    %cst_19 = arith.constant 1.000000e+00 : f32
    %31 = vector.broadcast %cst_19 : f32 to vector<1x128xf32>
    %32 = arith.addf %30, %31 : vector<1x128xf32>
    %33 = arith.mulf %24, %17 : vector<8x128xf32>
    %cst_20 = arith.constant dense<0.000000e+00> : vector<128xf32>
    %34 = vector.multi_reduction <add>, %33, %cst_20 [0] : vector<8x128xf32> to vector<128xf32>
    %35 = vector.shape_cast %34 : vector<128xf32> to vector<1x128xf32>
    %36 = arith.mulf %24, %23 : vector<8x128xf32>
    %cst_21 = arith.constant dense<0.000000e+00> : vector<128xf32>
    %37 = vector.multi_reduction <add>, %36, %cst_21 [0] : vector<8x128xf32> to vector<128xf32>
    %38 = vector.shape_cast %37 : vector<128xf32> to vector<1x128xf32>
    %cst_22 = arith.constant 1.000000e+00 : f32
    %39 = vector.broadcast %cst_22 : f32 to vector<1x128xf32>
    %40 = arith.addf %38, %39 : vector<1x128xf32>
    %41 = math.rsqrt %32 : vector<1x128xf32>
    %42 = arith.mulf %35, %41 : vector<1x128xf32>
    %43 = arith.mulf %42, %42 : vector<1x128xf32>
    %44 = arith.subf %40, %43 : vector<1x128xf32>
    %45 = math.rsqrt %44 : vector<1x128xf32>
    %46 = arith.mulf %32, %44 : vector<1x128xf32>
    %47 = arith.mulf %21, %41 : vector<1x128xf32>
    %48 = arith.mulf %42, %47 : vector<1x128xf32>
    %49 = arith.subf %27, %48 : vector<1x128xf32>
    %50 = arith.mulf %49, %45 : vector<1x128xf32>
    %51 = arith.mulf %47, %47 : vector<1x128xf32>
    %52 = arith.subf %15, %51 : vector<1x128xf32>
    %53 = arith.mulf %50, %50 : vector<1x128xf32>
    %54 = arith.subf %52, %53 : vector<1x128xf32>
    %c1_i32 = arith.constant 1 : i32
    %55 = tpu.dynamic_rotate %3 by %c1_i32 dim 0 : vector<8x128xf32>, i32 -> vector<8x128xf32>
    %56 = arith.mulf %3, %55 : vector<8x128xf32>
    %c2_i32 = arith.constant 2 : i32
    %57 = tpu.dynamic_rotate %56 by %c2_i32 dim 0 : vector<8x128xf32>, i32 -> vector<8x128xf32>
    %58 = arith.mulf %56, %57 : vector<8x128xf32>
    %c4_i32 = arith.constant 4 : i32
    %59 = tpu.dynamic_rotate %58 by %c4_i32 dim 0 : vector<8x128xf32>, i32 -> vector<8x128xf32>
    %60 = arith.mulf %58, %59 : vector<8x128xf32>
    %cst_23 = arith.constant dense<0xFF800000> : vector<128xf32>
    %61 = vector.multi_reduction <maximumf>, %60, %cst_23 [0] : vector<8x128xf32> to vector<128xf32>
    %62 = vector.shape_cast %61 : vector<128xf32> to vector<1x128xf32>
    %63 = arith.mulf %62, %46 : vector<1x128xf32>
    %64 = math.log %63 : vector<1x128xf32>
    %cst_24 = arith.constant 14.7030163 : f32
    %65 = vector.broadcast %cst_24 : f32 to vector<1x128xf32>
    %66 = arith.addf %65, %64 : vector<1x128xf32>
    %67 = arith.addf %66, %54 : vector<1x128xf32>
    %cst_25 = arith.constant -5.000000e-01 : f32
    %68 = vector.broadcast %cst_25 : f32 to vector<1x128xf32>
    %69 = arith.mulf %68, %67 : vector<1x128xf32>
    %c0_26 = arith.constant 0 : index
    %c0_27 = arith.constant 0 : index
    %c0_28 = arith.constant 0 : index
    %70 = vector.load %arg1[%c0_26, %c0_27, %c0_28] : memref<4x1x128xf32, #tpu.memory_space<vmem>>, vector<1x1x128xf32>
    %71 = vector.shape_cast %70 : vector<1x1x128xf32> to vector<1x128xf32>
    %72 = vector.broadcast %41 : vector<1x128xf32> to vector<8x128xf32>
    %73 = arith.mulf %18, %72 : vector<8x128xf32>
    %74 = vector.broadcast %42 : vector<1x128xf32> to vector<8x128xf32>
    %75 = arith.mulf %74, %73 : vector<8x128xf32>
    %76 = arith.subf %24, %75 : vector<8x128xf32>
    %77 = vector.broadcast %45 : vector<1x128xf32> to vector<8x128xf32>
    %78 = arith.mulf %76, %77 : vector<8x128xf32>
    %c1_i32_29 = arith.constant 1 : i32
    %79 = tpu.dynamic_rotate %73 by %c1_i32_29 dim 0 : vector<8x128xf32>, i32 -> vector<8x128xf32>
    %80 = arith.mulf %73, %79 : vector<8x128xf32>
    %c1_i32_30 = arith.constant 1 : i32
    %81 = tpu.dynamic_rotate %78 by %c1_i32_30 dim 0 : vector<8x128xf32>, i32 -> vector<8x128xf32>
    %82 = arith.mulf %78, %81 : vector<8x128xf32>
    %83 = arith.addf %80, %82 : vector<8x128xf32>
    %84 = math.absf %83 : vector<8x128xf32>
    %cst_31 = arith.constant dense<0.000000e+00> : vector<128xf32>
    %85 = vector.multi_reduction <add>, %84, %cst_31 [0] : vector<8x128xf32> to vector<128xf32>
    %86 = vector.shape_cast %85 : vector<128xf32> to vector<1x128xf32>
    %87 = arith.addf %86, %86 : vector<1x128xf32>
    %88 = arith.addf %1, %87 : vector<1x128xf32>
    %c2_i32_32 = arith.constant 2 : i32
    %89 = tpu.dynamic_rotate %73 by %c2_i32_32 dim 0 : vector<8x128xf32>, i32 -> vector<8x128xf32>
    %90 = arith.mulf %73, %89 : vector<8x128xf32>
    %c2_i32_33 = arith.constant 2 : i32
    %91 = tpu.dynamic_rotate %78 by %c2_i32_33 dim 0 : vector<8x128xf32>, i32 -> vector<8x128xf32>
    %92 = arith.mulf %78, %91 : vector<8x128xf32>
    %93 = arith.addf %90, %92 : vector<8x128xf32>
    %94 = math.absf %93 : vector<8x128xf32>
    %cst_34 = arith.constant dense<0.000000e+00> : vector<128xf32>
    %95 = vector.multi_reduction <add>, %94, %cst_34 [0] : vector<8x128xf32> to vector<128xf32>
    %96 = vector.shape_cast %95 : vector<128xf32> to vector<1x128xf32>
    %97 = arith.addf %96, %96 : vector<1x128xf32>
    %98 = arith.addf %88, %97 : vector<1x128xf32>
    %c3_i32 = arith.constant 3 : i32
    %99 = tpu.dynamic_rotate %73 by %c3_i32 dim 0 : vector<8x128xf32>, i32 -> vector<8x128xf32>
    %100 = arith.mulf %73, %99 : vector<8x128xf32>
    %c3_i32_35 = arith.constant 3 : i32
    %101 = tpu.dynamic_rotate %78 by %c3_i32_35 dim 0 : vector<8x128xf32>, i32 -> vector<8x128xf32>
    %102 = arith.mulf %78, %101 : vector<8x128xf32>
    %103 = arith.addf %100, %102 : vector<8x128xf32>
    %104 = math.absf %103 : vector<8x128xf32>
    %cst_36 = arith.constant dense<0.000000e+00> : vector<128xf32>
    %105 = vector.multi_reduction <add>, %104, %cst_36 [0] : vector<8x128xf32> to vector<128xf32>
    %106 = vector.shape_cast %105 : vector<128xf32> to vector<1x128xf32>
    %107 = arith.addf %106, %106 : vector<1x128xf32>
    %108 = arith.addf %98, %107 : vector<1x128xf32>
    %c4_i32_37 = arith.constant 4 : i32
    %109 = tpu.dynamic_rotate %73 by %c4_i32_37 dim 0 : vector<8x128xf32>, i32 -> vector<8x128xf32>
    %110 = arith.mulf %73, %109 : vector<8x128xf32>
    %c4_i32_38 = arith.constant 4 : i32
    %111 = tpu.dynamic_rotate %78 by %c4_i32_38 dim 0 : vector<8x128xf32>, i32 -> vector<8x128xf32>
    %112 = arith.mulf %78, %111 : vector<8x128xf32>
    %113 = arith.addf %110, %112 : vector<8x128xf32>
    %114 = math.absf %113 : vector<8x128xf32>
    %cst_39 = arith.constant dense<0.000000e+00> : vector<128xf32>
    %115 = vector.multi_reduction <add>, %114, %cst_39 [0] : vector<8x128xf32> to vector<128xf32>
    %116 = vector.shape_cast %115 : vector<128xf32> to vector<1x128xf32>
    %117 = arith.addf %108, %116 : vector<1x128xf32>
    %c1_40 = arith.constant 1 : index
    %c0_41 = arith.constant 0 : index
    %c0_42 = arith.constant 0 : index
    %118 = vector.load %arg3[%c1_40, %c0_41, %c0_42] : memref<4x8x128xf32, #tpu.memory_space<vmem>>, vector<1x8x128xf32>
    %119 = vector.shape_cast %118 : vector<1x8x128xf32> to vector<8x128xf32>
    %c1_43 = arith.constant 1 : index
    %c0_44 = arith.constant 0 : index
    %c0_45 = arith.constant 0 : index
    %120 = vector.load %arg2[%c1_43, %c0_44, %c0_45] : memref<4x8x128xf32, #tpu.memory_space<vmem>>, vector<1x8x128xf32>
    %121 = vector.shape_cast %120 : vector<1x8x128xf32> to vector<8x128xf32>
    %122 = tpu.reciprocal %119 {approx = true} : vector<8x128xf32> -> vector<8x128xf32>
    %123 = arith.mulf %119, %122 : vector<8x128xf32>
    %cst_46 = arith.constant 2.000000e+00 : f32
    %124 = vector.broadcast %cst_46 : f32 to vector<8x128xf32>
    %125 = arith.subf %124, %123 : vector<8x128xf32>
    %126 = arith.mulf %122, %125 : vector<8x128xf32>
    %127 = arith.subf %0, %121 : vector<8x128xf32>
    %128 = arith.mulf %127, %127 : vector<8x128xf32>
    %129 = arith.mulf %128, %126 : vector<8x128xf32>
    %cst_47 = arith.constant dense<0.000000e+00> : vector<128xf32>
    %130 = vector.multi_reduction <add>, %129, %cst_47 [0] : vector<8x128xf32> to vector<128xf32>
    %131 = vector.shape_cast %130 : vector<128xf32> to vector<1x128xf32>
    %c1_48 = arith.constant 1 : index
    %c0_49 = arith.constant 0 : index
    %c0_50 = arith.constant 0 : index
    %c0_51 = arith.constant 0 : index
    %132 = vector.load %arg4[%c1_48, %c0_49, %c0_50, %c0_51] : memref<4x2x8x128xf32, #tpu.memory_space<vmem>>, vector<1x1x8x128xf32>
    %133 = vector.shape_cast %132 : vector<1x1x8x128xf32> to vector<8x128xf32>
    %134 = arith.mulf %133, %126 : vector<8x128xf32>
    %135 = arith.mulf %134, %127 : vector<8x128xf32>
    %cst_52 = arith.constant dense<0.000000e+00> : vector<128xf32>
    %136 = vector.multi_reduction <add>, %135, %cst_52 [0] : vector<8x128xf32> to vector<128xf32>
    %137 = vector.shape_cast %136 : vector<128xf32> to vector<1x128xf32>
    %c1_53 = arith.constant 1 : index
    %c1_54 = arith.constant 1 : index
    %c0_55 = arith.constant 0 : index
    %c0_56 = arith.constant 0 : index
    %138 = vector.load %arg4[%c1_53, %c1_54, %c0_55, %c0_56] : memref<4x2x8x128xf32, #tpu.memory_space<vmem>>, vector<1x1x8x128xf32>
    %139 = vector.shape_cast %138 : vector<1x1x8x128xf32> to vector<8x128xf32>
    %140 = arith.mulf %139, %126 : vector<8x128xf32>
    %141 = arith.mulf %140, %127 : vector<8x128xf32>
    %cst_57 = arith.constant dense<0.000000e+00> : vector<128xf32>
    %142 = vector.multi_reduction <add>, %141, %cst_57 [0] : vector<8x128xf32> to vector<128xf32>
    %143 = vector.shape_cast %142 : vector<128xf32> to vector<1x128xf32>
    %144 = arith.mulf %134, %133 : vector<8x128xf32>
    %cst_58 = arith.constant dense<0.000000e+00> : vector<128xf32>
    %145 = vector.multi_reduction <add>, %144, %cst_58 [0] : vector<8x128xf32> to vector<128xf32>
    %146 = vector.shape_cast %145 : vector<128xf32> to vector<1x128xf32>
    %cst_59 = arith.constant 1.000000e+00 : f32
    %147 = vector.broadcast %cst_59 : f32 to vector<1x128xf32>
    %148 = arith.addf %146, %147 : vector<1x128xf32>
    %149 = arith.mulf %140, %133 : vector<8x128xf32>
    %cst_60 = arith.constant dense<0.000000e+00> : vector<128xf32>
    %150 = vector.multi_reduction <add>, %149, %cst_60 [0] : vector<8x128xf32> to vector<128xf32>
    %151 = vector.shape_cast %150 : vector<128xf32> to vector<1x128xf32>
    %152 = arith.mulf %140, %139 : vector<8x128xf32>
    %cst_61 = arith.constant dense<0.000000e+00> : vector<128xf32>
    %153 = vector.multi_reduction <add>, %152, %cst_61 [0] : vector<8x128xf32> to vector<128xf32>
    %154 = vector.shape_cast %153 : vector<128xf32> to vector<1x128xf32>
    %cst_62 = arith.constant 1.000000e+00 : f32
    %155 = vector.broadcast %cst_62 : f32 to vector<1x128xf32>
    %156 = arith.addf %154, %155 : vector<1x128xf32>
    %157 = math.rsqrt %148 : vector<1x128xf32>
    %158 = arith.mulf %151, %157 : vector<1x128xf32>
    %159 = arith.mulf %158, %158 : vector<1x128xf32>
    %160 = arith.subf %156, %159 : vector<1x128xf32>
    %161 = math.rsqrt %160 : vector<1x128xf32>
    %162 = arith.mulf %148, %160 : vector<1x128xf32>
    %163 = arith.mulf %137, %157 : vector<1x128xf32>
    %164 = arith.mulf %158, %163 : vector<1x128xf32>
    %165 = arith.subf %143, %164 : vector<1x128xf32>
    %166 = arith.mulf %165, %161 : vector<1x128xf32>
    %167 = arith.mulf %163, %163 : vector<1x128xf32>
    %168 = arith.subf %131, %167 : vector<1x128xf32>
    %169 = arith.mulf %166, %166 : vector<1x128xf32>
    %170 = arith.subf %168, %169 : vector<1x128xf32>
    %c1_i32_63 = arith.constant 1 : i32
    %171 = tpu.dynamic_rotate %119 by %c1_i32_63 dim 0 : vector<8x128xf32>, i32 -> vector<8x128xf32>
    %172 = arith.mulf %119, %171 : vector<8x128xf32>
    %c2_i32_64 = arith.constant 2 : i32
    %173 = tpu.dynamic_rotate %172 by %c2_i32_64 dim 0 : vector<8x128xf32>, i32 -> vector<8x128xf32>
    %174 = arith.mulf %172, %173 : vector<8x128xf32>
    %c4_i32_65 = arith.constant 4 : i32
    %175 = tpu.dynamic_rotate %174 by %c4_i32_65 dim 0 : vector<8x128xf32>, i32 -> vector<8x128xf32>
    %176 = arith.mulf %174, %175 : vector<8x128xf32>
    %cst_66 = arith.constant dense<0xFF800000> : vector<128xf32>
    %177 = vector.multi_reduction <maximumf>, %176, %cst_66 [0] : vector<8x128xf32> to vector<128xf32>
    %178 = vector.shape_cast %177 : vector<128xf32> to vector<1x128xf32>
    %179 = arith.mulf %178, %162 : vector<1x128xf32>
    %180 = math.log %179 : vector<1x128xf32>
    %cst_67 = arith.constant 14.7030163 : f32
    %181 = vector.broadcast %cst_67 : f32 to vector<1x128xf32>
    %182 = arith.addf %181, %180 : vector<1x128xf32>
    %183 = arith.addf %182, %170 : vector<1x128xf32>
    %cst_68 = arith.constant -5.000000e-01 : f32
    %184 = vector.broadcast %cst_68 : f32 to vector<1x128xf32>
    %185 = arith.mulf %184, %183 : vector<1x128xf32>
    %c1_69 = arith.constant 1 : index
    %c0_70 = arith.constant 0 : index
    %c0_71 = arith.constant 0 : index
    %186 = vector.load %arg1[%c1_69, %c0_70, %c0_71] : memref<4x1x128xf32, #tpu.memory_space<vmem>>, vector<1x1x128xf32>
    %187 = vector.shape_cast %186 : vector<1x1x128xf32> to vector<1x128xf32>
    %188 = vector.broadcast %157 : vector<1x128xf32> to vector<8x128xf32>
    %189 = arith.mulf %134, %188 : vector<8x128xf32>
    %190 = vector.broadcast %158 : vector<1x128xf32> to vector<8x128xf32>
    %191 = arith.mulf %190, %189 : vector<8x128xf32>
    %192 = arith.subf %140, %191 : vector<8x128xf32>
    %193 = vector.broadcast %161 : vector<1x128xf32> to vector<8x128xf32>
    %194 = arith.mulf %192, %193 : vector<8x128xf32>
    %c1_i32_72 = arith.constant 1 : i32
    %195 = tpu.dynamic_rotate %189 by %c1_i32_72 dim 0 : vector<8x128xf32>, i32 -> vector<8x128xf32>
    %196 = arith.mulf %189, %195 : vector<8x128xf32>
    %c1_i32_73 = arith.constant 1 : i32
    %197 = tpu.dynamic_rotate %194 by %c1_i32_73 dim 0 : vector<8x128xf32>, i32 -> vector<8x128xf32>
    %198 = arith.mulf %194, %197 : vector<8x128xf32>
    %199 = arith.addf %196, %198 : vector<8x128xf32>
    %200 = math.absf %199 : vector<8x128xf32>
    %cst_74 = arith.constant dense<0.000000e+00> : vector<128xf32>
    %201 = vector.multi_reduction <add>, %200, %cst_74 [0] : vector<8x128xf32> to vector<128xf32>
    %202 = vector.shape_cast %201 : vector<128xf32> to vector<1x128xf32>
    %203 = arith.addf %202, %202 : vector<1x128xf32>
    %204 = arith.addf %117, %203 : vector<1x128xf32>
    %c2_i32_75 = arith.constant 2 : i32
    %205 = tpu.dynamic_rotate %189 by %c2_i32_75 dim 0 : vector<8x128xf32>, i32 -> vector<8x128xf32>
    %206 = arith.mulf %189, %205 : vector<8x128xf32>
    %c2_i32_76 = arith.constant 2 : i32
    %207 = tpu.dynamic_rotate %194 by %c2_i32_76 dim 0 : vector<8x128xf32>, i32 -> vector<8x128xf32>
    %208 = arith.mulf %194, %207 : vector<8x128xf32>
    %209 = arith.addf %206, %208 : vector<8x128xf32>
    %210 = math.absf %209 : vector<8x128xf32>
    %cst_77 = arith.constant dense<0.000000e+00> : vector<128xf32>
    %211 = vector.multi_reduction <add>, %210, %cst_77 [0] : vector<8x128xf32> to vector<128xf32>
    %212 = vector.shape_cast %211 : vector<128xf32> to vector<1x128xf32>
    %213 = arith.addf %212, %212 : vector<1x128xf32>
    %214 = arith.addf %204, %213 : vector<1x128xf32>
    %c3_i32_78 = arith.constant 3 : i32
    %215 = tpu.dynamic_rotate %189 by %c3_i32_78 dim 0 : vector<8x128xf32>, i32 -> vector<8x128xf32>
    %216 = arith.mulf %189, %215 : vector<8x128xf32>
    %c3_i32_79 = arith.constant 3 : i32
    %217 = tpu.dynamic_rotate %194 by %c3_i32_79 dim 0 : vector<8x128xf32>, i32 -> vector<8x128xf32>
    %218 = arith.mulf %194, %217 : vector<8x128xf32>
    %219 = arith.addf %216, %218 : vector<8x128xf32>
    %220 = math.absf %219 : vector<8x128xf32>
    %cst_80 = arith.constant dense<0.000000e+00> : vector<128xf32>
    %221 = vector.multi_reduction <add>, %220, %cst_80 [0] : vector<8x128xf32> to vector<128xf32>
    %222 = vector.shape_cast %221 : vector<128xf32> to vector<1x128xf32>
    %223 = arith.addf %222, %222 : vector<1x128xf32>
    %224 = arith.addf %214, %223 : vector<1x128xf32>
    %c4_i32_81 = arith.constant 4 : i32
    %225 = tpu.dynamic_rotate %189 by %c4_i32_81 dim 0 : vector<8x128xf32>, i32 -> vector<8x128xf32>
    %226 = arith.mulf %189, %225 : vector<8x128xf32>
    %c4_i32_82 = arith.constant 4 : i32
    %227 = tpu.dynamic_rotate %194 by %c4_i32_82 dim 0 : vector<8x128xf32>, i32 -> vector<8x128xf32>
    %228 = arith.mulf %194, %227 : vector<8x128xf32>
    %229 = arith.addf %226, %228 : vector<8x128xf32>
    %230 = math.absf %229 : vector<8x128xf32>
    %cst_83 = arith.constant dense<0.000000e+00> : vector<128xf32>
    %231 = vector.multi_reduction <add>, %230, %cst_83 [0] : vector<8x128xf32> to vector<128xf32>
    %232 = vector.shape_cast %231 : vector<128xf32> to vector<1x128xf32>
    %233 = arith.addf %224, %232 : vector<1x128xf32>
    %c2 = arith.constant 2 : index
    %c0_84 = arith.constant 0 : index
    %c0_85 = arith.constant 0 : index
    %234 = vector.load %arg3[%c2, %c0_84, %c0_85] : memref<4x8x128xf32, #tpu.memory_space<vmem>>, vector<1x8x128xf32>
    %235 = vector.shape_cast %234 : vector<1x8x128xf32> to vector<8x128xf32>
    %c2_86 = arith.constant 2 : index
    %c0_87 = arith.constant 0 : index
    %c0_88 = arith.constant 0 : index
    %236 = vector.load %arg2[%c2_86, %c0_87, %c0_88] : memref<4x8x128xf32, #tpu.memory_space<vmem>>, vector<1x8x128xf32>
    %237 = vector.shape_cast %236 : vector<1x8x128xf32> to vector<8x128xf32>
    %238 = tpu.reciprocal %235 {approx = true} : vector<8x128xf32> -> vector<8x128xf32>
    %239 = arith.mulf %235, %238 : vector<8x128xf32>
    %cst_89 = arith.constant 2.000000e+00 : f32
    %240 = vector.broadcast %cst_89 : f32 to vector<8x128xf32>
    %241 = arith.subf %240, %239 : vector<8x128xf32>
    %242 = arith.mulf %238, %241 : vector<8x128xf32>
    %243 = arith.subf %0, %237 : vector<8x128xf32>
    %244 = arith.mulf %243, %243 : vector<8x128xf32>
    %245 = arith.mulf %244, %242 : vector<8x128xf32>
    %cst_90 = arith.constant dense<0.000000e+00> : vector<128xf32>
    %246 = vector.multi_reduction <add>, %245, %cst_90 [0] : vector<8x128xf32> to vector<128xf32>
    %247 = vector.shape_cast %246 : vector<128xf32> to vector<1x128xf32>
    %c2_91 = arith.constant 2 : index
    %c0_92 = arith.constant 0 : index
    %c0_93 = arith.constant 0 : index
    %c0_94 = arith.constant 0 : index
    %248 = vector.load %arg4[%c2_91, %c0_92, %c0_93, %c0_94] : memref<4x2x8x128xf32, #tpu.memory_space<vmem>>, vector<1x1x8x128xf32>
    %249 = vector.shape_cast %248 : vector<1x1x8x128xf32> to vector<8x128xf32>
    %250 = arith.mulf %249, %242 : vector<8x128xf32>
    %251 = arith.mulf %250, %243 : vector<8x128xf32>
    %cst_95 = arith.constant dense<0.000000e+00> : vector<128xf32>
    %252 = vector.multi_reduction <add>, %251, %cst_95 [0] : vector<8x128xf32> to vector<128xf32>
    %253 = vector.shape_cast %252 : vector<128xf32> to vector<1x128xf32>
    %c2_96 = arith.constant 2 : index
    %c1_97 = arith.constant 1 : index
    %c0_98 = arith.constant 0 : index
    %c0_99 = arith.constant 0 : index
    %254 = vector.load %arg4[%c2_96, %c1_97, %c0_98, %c0_99] : memref<4x2x8x128xf32, #tpu.memory_space<vmem>>, vector<1x1x8x128xf32>
    %255 = vector.shape_cast %254 : vector<1x1x8x128xf32> to vector<8x128xf32>
    %256 = arith.mulf %255, %242 : vector<8x128xf32>
    %257 = arith.mulf %256, %243 : vector<8x128xf32>
    %cst_100 = arith.constant dense<0.000000e+00> : vector<128xf32>
    %258 = vector.multi_reduction <add>, %257, %cst_100 [0] : vector<8x128xf32> to vector<128xf32>
    %259 = vector.shape_cast %258 : vector<128xf32> to vector<1x128xf32>
    %260 = arith.mulf %250, %249 : vector<8x128xf32>
    %cst_101 = arith.constant dense<0.000000e+00> : vector<128xf32>
    %261 = vector.multi_reduction <add>, %260, %cst_101 [0] : vector<8x128xf32> to vector<128xf32>
    %262 = vector.shape_cast %261 : vector<128xf32> to vector<1x128xf32>
    %cst_102 = arith.constant 1.000000e+00 : f32
    %263 = vector.broadcast %cst_102 : f32 to vector<1x128xf32>
    %264 = arith.addf %262, %263 : vector<1x128xf32>
    %265 = arith.mulf %256, %249 : vector<8x128xf32>
    %cst_103 = arith.constant dense<0.000000e+00> : vector<128xf32>
    %266 = vector.multi_reduction <add>, %265, %cst_103 [0] : vector<8x128xf32> to vector<128xf32>
    %267 = vector.shape_cast %266 : vector<128xf32> to vector<1x128xf32>
    %268 = arith.mulf %256, %255 : vector<8x128xf32>
    %cst_104 = arith.constant dense<0.000000e+00> : vector<128xf32>
    %269 = vector.multi_reduction <add>, %268, %cst_104 [0] : vector<8x128xf32> to vector<128xf32>
    %270 = vector.shape_cast %269 : vector<128xf32> to vector<1x128xf32>
    %cst_105 = arith.constant 1.000000e+00 : f32
    %271 = vector.broadcast %cst_105 : f32 to vector<1x128xf32>
    %272 = arith.addf %270, %271 : vector<1x128xf32>
    %273 = math.rsqrt %264 : vector<1x128xf32>
    %274 = arith.mulf %267, %273 : vector<1x128xf32>
    %275 = arith.mulf %274, %274 : vector<1x128xf32>
    %276 = arith.subf %272, %275 : vector<1x128xf32>
    %277 = math.rsqrt %276 : vector<1x128xf32>
    %278 = arith.mulf %264, %276 : vector<1x128xf32>
    %279 = arith.mulf %253, %273 : vector<1x128xf32>
    %280 = arith.mulf %274, %279 : vector<1x128xf32>
    %281 = arith.subf %259, %280 : vector<1x128xf32>
    %282 = arith.mulf %281, %277 : vector<1x128xf32>
    %283 = arith.mulf %279, %279 : vector<1x128xf32>
    %284 = arith.subf %247, %283 : vector<1x128xf32>
    %285 = arith.mulf %282, %282 : vector<1x128xf32>
    %286 = arith.subf %284, %285 : vector<1x128xf32>
    %c1_i32_106 = arith.constant 1 : i32
    %287 = tpu.dynamic_rotate %235 by %c1_i32_106 dim 0 : vector<8x128xf32>, i32 -> vector<8x128xf32>
    %288 = arith.mulf %235, %287 : vector<8x128xf32>
    %c2_i32_107 = arith.constant 2 : i32
    %289 = tpu.dynamic_rotate %288 by %c2_i32_107 dim 0 : vector<8x128xf32>, i32 -> vector<8x128xf32>
    %290 = arith.mulf %288, %289 : vector<8x128xf32>
    %c4_i32_108 = arith.constant 4 : i32
    %291 = tpu.dynamic_rotate %290 by %c4_i32_108 dim 0 : vector<8x128xf32>, i32 -> vector<8x128xf32>
    %292 = arith.mulf %290, %291 : vector<8x128xf32>
    %cst_109 = arith.constant dense<0xFF800000> : vector<128xf32>
    %293 = vector.multi_reduction <maximumf>, %292, %cst_109 [0] : vector<8x128xf32> to vector<128xf32>
    %294 = vector.shape_cast %293 : vector<128xf32> to vector<1x128xf32>
    %295 = arith.mulf %294, %278 : vector<1x128xf32>
    %296 = math.log %295 : vector<1x128xf32>
    %cst_110 = arith.constant 14.7030163 : f32
    %297 = vector.broadcast %cst_110 : f32 to vector<1x128xf32>
    %298 = arith.addf %297, %296 : vector<1x128xf32>
    %299 = arith.addf %298, %286 : vector<1x128xf32>
    %cst_111 = arith.constant -5.000000e-01 : f32
    %300 = vector.broadcast %cst_111 : f32 to vector<1x128xf32>
    %301 = arith.mulf %300, %299 : vector<1x128xf32>
    %c2_112 = arith.constant 2 : index
    %c0_113 = arith.constant 0 : index
    %c0_114 = arith.constant 0 : index
    %302 = vector.load %arg1[%c2_112, %c0_113, %c0_114] : memref<4x1x128xf32, #tpu.memory_space<vmem>>, vector<1x1x128xf32>
    %303 = vector.shape_cast %302 : vector<1x1x128xf32> to vector<1x128xf32>
    %304 = vector.broadcast %273 : vector<1x128xf32> to vector<8x128xf32>
    %305 = arith.mulf %250, %304 : vector<8x128xf32>
    %306 = vector.broadcast %274 : vector<1x128xf32> to vector<8x128xf32>
    %307 = arith.mulf %306, %305 : vector<8x128xf32>
    %308 = arith.subf %256, %307 : vector<8x128xf32>
    %309 = vector.broadcast %277 : vector<1x128xf32> to vector<8x128xf32>
    %310 = arith.mulf %308, %309 : vector<8x128xf32>
    %c1_i32_115 = arith.constant 1 : i32
    %311 = tpu.dynamic_rotate %305 by %c1_i32_115 dim 0 : vector<8x128xf32>, i32 -> vector<8x128xf32>
    %312 = arith.mulf %305, %311 : vector<8x128xf32>
    %c1_i32_116 = arith.constant 1 : i32
    %313 = tpu.dynamic_rotate %310 by %c1_i32_116 dim 0 : vector<8x128xf32>, i32 -> vector<8x128xf32>
    %314 = arith.mulf %310, %313 : vector<8x128xf32>
    %315 = arith.addf %312, %314 : vector<8x128xf32>
    %316 = math.absf %315 : vector<8x128xf32>
    %cst_117 = arith.constant dense<0.000000e+00> : vector<128xf32>
    %317 = vector.multi_reduction <add>, %316, %cst_117 [0] : vector<8x128xf32> to vector<128xf32>
    %318 = vector.shape_cast %317 : vector<128xf32> to vector<1x128xf32>
    %319 = arith.addf %318, %318 : vector<1x128xf32>
    %320 = arith.addf %233, %319 : vector<1x128xf32>
    %c2_i32_118 = arith.constant 2 : i32
    %321 = tpu.dynamic_rotate %305 by %c2_i32_118 dim 0 : vector<8x128xf32>, i32 -> vector<8x128xf32>
    %322 = arith.mulf %305, %321 : vector<8x128xf32>
    %c2_i32_119 = arith.constant 2 : i32
    %323 = tpu.dynamic_rotate %310 by %c2_i32_119 dim 0 : vector<8x128xf32>, i32 -> vector<8x128xf32>
    %324 = arith.mulf %310, %323 : vector<8x128xf32>
    %325 = arith.addf %322, %324 : vector<8x128xf32>
    %326 = math.absf %325 : vector<8x128xf32>
    %cst_120 = arith.constant dense<0.000000e+00> : vector<128xf32>
    %327 = vector.multi_reduction <add>, %326, %cst_120 [0] : vector<8x128xf32> to vector<128xf32>
    %328 = vector.shape_cast %327 : vector<128xf32> to vector<1x128xf32>
    %329 = arith.addf %328, %328 : vector<1x128xf32>
    %330 = arith.addf %320, %329 : vector<1x128xf32>
    %c3_i32_121 = arith.constant 3 : i32
    %331 = tpu.dynamic_rotate %305 by %c3_i32_121 dim 0 : vector<8x128xf32>, i32 -> vector<8x128xf32>
    %332 = arith.mulf %305, %331 : vector<8x128xf32>
    %c3_i32_122 = arith.constant 3 : i32
    %333 = tpu.dynamic_rotate %310 by %c3_i32_122 dim 0 : vector<8x128xf32>, i32 -> vector<8x128xf32>
    %334 = arith.mulf %310, %333 : vector<8x128xf32>
    %335 = arith.addf %332, %334 : vector<8x128xf32>
    %336 = math.absf %335 : vector<8x128xf32>
    %cst_123 = arith.constant dense<0.000000e+00> : vector<128xf32>
    %337 = vector.multi_reduction <add>, %336, %cst_123 [0] : vector<8x128xf32> to vector<128xf32>
    %338 = vector.shape_cast %337 : vector<128xf32> to vector<1x128xf32>
    %339 = arith.addf %338, %338 : vector<1x128xf32>
    %340 = arith.addf %330, %339 : vector<1x128xf32>
    %c4_i32_124 = arith.constant 4 : i32
    %341 = tpu.dynamic_rotate %305 by %c4_i32_124 dim 0 : vector<8x128xf32>, i32 -> vector<8x128xf32>
    %342 = arith.mulf %305, %341 : vector<8x128xf32>
    %c4_i32_125 = arith.constant 4 : i32
    %343 = tpu.dynamic_rotate %310 by %c4_i32_125 dim 0 : vector<8x128xf32>, i32 -> vector<8x128xf32>
    %344 = arith.mulf %310, %343 : vector<8x128xf32>
    %345 = arith.addf %342, %344 : vector<8x128xf32>
    %346 = math.absf %345 : vector<8x128xf32>
    %cst_126 = arith.constant dense<0.000000e+00> : vector<128xf32>
    %347 = vector.multi_reduction <add>, %346, %cst_126 [0] : vector<8x128xf32> to vector<128xf32>
    %348 = vector.shape_cast %347 : vector<128xf32> to vector<1x128xf32>
    %349 = arith.addf %340, %348 : vector<1x128xf32>
    %c3 = arith.constant 3 : index
    %c0_127 = arith.constant 0 : index
    %c0_128 = arith.constant 0 : index
    %350 = vector.load %arg3[%c3, %c0_127, %c0_128] : memref<4x8x128xf32, #tpu.memory_space<vmem>>, vector<1x8x128xf32>
    %351 = vector.shape_cast %350 : vector<1x8x128xf32> to vector<8x128xf32>
    %c3_129 = arith.constant 3 : index
    %c0_130 = arith.constant 0 : index
    %c0_131 = arith.constant 0 : index
    %352 = vector.load %arg2[%c3_129, %c0_130, %c0_131] : memref<4x8x128xf32, #tpu.memory_space<vmem>>, vector<1x8x128xf32>
    %353 = vector.shape_cast %352 : vector<1x8x128xf32> to vector<8x128xf32>
    %354 = tpu.reciprocal %351 {approx = true} : vector<8x128xf32> -> vector<8x128xf32>
    %355 = arith.mulf %351, %354 : vector<8x128xf32>
    %cst_132 = arith.constant 2.000000e+00 : f32
    %356 = vector.broadcast %cst_132 : f32 to vector<8x128xf32>
    %357 = arith.subf %356, %355 : vector<8x128xf32>
    %358 = arith.mulf %354, %357 : vector<8x128xf32>
    %359 = arith.subf %0, %353 : vector<8x128xf32>
    %360 = arith.mulf %359, %359 : vector<8x128xf32>
    %361 = arith.mulf %360, %358 : vector<8x128xf32>
    %cst_133 = arith.constant dense<0.000000e+00> : vector<128xf32>
    %362 = vector.multi_reduction <add>, %361, %cst_133 [0] : vector<8x128xf32> to vector<128xf32>
    %363 = vector.shape_cast %362 : vector<128xf32> to vector<1x128xf32>
    %c3_134 = arith.constant 3 : index
    %c0_135 = arith.constant 0 : index
    %c0_136 = arith.constant 0 : index
    %c0_137 = arith.constant 0 : index
    %364 = vector.load %arg4[%c3_134, %c0_135, %c0_136, %c0_137] : memref<4x2x8x128xf32, #tpu.memory_space<vmem>>, vector<1x1x8x128xf32>
    %365 = vector.shape_cast %364 : vector<1x1x8x128xf32> to vector<8x128xf32>
    %366 = arith.mulf %365, %358 : vector<8x128xf32>
    %367 = arith.mulf %366, %359 : vector<8x128xf32>
    %cst_138 = arith.constant dense<0.000000e+00> : vector<128xf32>
    %368 = vector.multi_reduction <add>, %367, %cst_138 [0] : vector<8x128xf32> to vector<128xf32>
    %369 = vector.shape_cast %368 : vector<128xf32> to vector<1x128xf32>
    %c3_139 = arith.constant 3 : index
    %c1_140 = arith.constant 1 : index
    %c0_141 = arith.constant 0 : index
    %c0_142 = arith.constant 0 : index
    %370 = vector.load %arg4[%c3_139, %c1_140, %c0_141, %c0_142] : memref<4x2x8x128xf32, #tpu.memory_space<vmem>>, vector<1x1x8x128xf32>
    %371 = vector.shape_cast %370 : vector<1x1x8x128xf32> to vector<8x128xf32>
    %372 = arith.mulf %371, %358 : vector<8x128xf32>
    %373 = arith.mulf %372, %359 : vector<8x128xf32>
    %cst_143 = arith.constant dense<0.000000e+00> : vector<128xf32>
    %374 = vector.multi_reduction <add>, %373, %cst_143 [0] : vector<8x128xf32> to vector<128xf32>
    %375 = vector.shape_cast %374 : vector<128xf32> to vector<1x128xf32>
    %376 = arith.mulf %366, %365 : vector<8x128xf32>
    %cst_144 = arith.constant dense<0.000000e+00> : vector<128xf32>
    %377 = vector.multi_reduction <add>, %376, %cst_144 [0] : vector<8x128xf32> to vector<128xf32>
    %378 = vector.shape_cast %377 : vector<128xf32> to vector<1x128xf32>
    %cst_145 = arith.constant 1.000000e+00 : f32
    %379 = vector.broadcast %cst_145 : f32 to vector<1x128xf32>
    %380 = arith.addf %378, %379 : vector<1x128xf32>
    %381 = arith.mulf %372, %365 : vector<8x128xf32>
    %cst_146 = arith.constant dense<0.000000e+00> : vector<128xf32>
    %382 = vector.multi_reduction <add>, %381, %cst_146 [0] : vector<8x128xf32> to vector<128xf32>
    %383 = vector.shape_cast %382 : vector<128xf32> to vector<1x128xf32>
    %384 = arith.mulf %372, %371 : vector<8x128xf32>
    %cst_147 = arith.constant dense<0.000000e+00> : vector<128xf32>
    %385 = vector.multi_reduction <add>, %384, %cst_147 [0] : vector<8x128xf32> to vector<128xf32>
    %386 = vector.shape_cast %385 : vector<128xf32> to vector<1x128xf32>
    %cst_148 = arith.constant 1.000000e+00 : f32
    %387 = vector.broadcast %cst_148 : f32 to vector<1x128xf32>
    %388 = arith.addf %386, %387 : vector<1x128xf32>
    %389 = math.rsqrt %380 : vector<1x128xf32>
    %390 = arith.mulf %383, %389 : vector<1x128xf32>
    %391 = arith.mulf %390, %390 : vector<1x128xf32>
    %392 = arith.subf %388, %391 : vector<1x128xf32>
    %393 = math.rsqrt %392 : vector<1x128xf32>
    %394 = arith.mulf %380, %392 : vector<1x128xf32>
    %395 = arith.mulf %369, %389 : vector<1x128xf32>
    %396 = arith.mulf %390, %395 : vector<1x128xf32>
    %397 = arith.subf %375, %396 : vector<1x128xf32>
    %398 = arith.mulf %397, %393 : vector<1x128xf32>
    %399 = arith.mulf %395, %395 : vector<1x128xf32>
    %400 = arith.subf %363, %399 : vector<1x128xf32>
    %401 = arith.mulf %398, %398 : vector<1x128xf32>
    %402 = arith.subf %400, %401 : vector<1x128xf32>
    %c1_i32_149 = arith.constant 1 : i32
    %403 = tpu.dynamic_rotate %351 by %c1_i32_149 dim 0 : vector<8x128xf32>, i32 -> vector<8x128xf32>
    %404 = arith.mulf %351, %403 : vector<8x128xf32>
    %c2_i32_150 = arith.constant 2 : i32
    %405 = tpu.dynamic_rotate %404 by %c2_i32_150 dim 0 : vector<8x128xf32>, i32 -> vector<8x128xf32>
    %406 = arith.mulf %404, %405 : vector<8x128xf32>
    %c4_i32_151 = arith.constant 4 : i32
    %407 = tpu.dynamic_rotate %406 by %c4_i32_151 dim 0 : vector<8x128xf32>, i32 -> vector<8x128xf32>
    %408 = arith.mulf %406, %407 : vector<8x128xf32>
    %cst_152 = arith.constant dense<0xFF800000> : vector<128xf32>
    %409 = vector.multi_reduction <maximumf>, %408, %cst_152 [0] : vector<8x128xf32> to vector<128xf32>
    %410 = vector.shape_cast %409 : vector<128xf32> to vector<1x128xf32>
    %411 = arith.mulf %410, %394 : vector<1x128xf32>
    %412 = math.log %411 : vector<1x128xf32>
    %cst_153 = arith.constant 14.7030163 : f32
    %413 = vector.broadcast %cst_153 : f32 to vector<1x128xf32>
    %414 = arith.addf %413, %412 : vector<1x128xf32>
    %415 = arith.addf %414, %402 : vector<1x128xf32>
    %cst_154 = arith.constant -5.000000e-01 : f32
    %416 = vector.broadcast %cst_154 : f32 to vector<1x128xf32>
    %417 = arith.mulf %416, %415 : vector<1x128xf32>
    %c3_155 = arith.constant 3 : index
    %c0_156 = arith.constant 0 : index
    %c0_157 = arith.constant 0 : index
    %418 = vector.load %arg1[%c3_155, %c0_156, %c0_157] : memref<4x1x128xf32, #tpu.memory_space<vmem>>, vector<1x1x128xf32>
    %419 = vector.shape_cast %418 : vector<1x1x128xf32> to vector<1x128xf32>
    %420 = vector.broadcast %389 : vector<1x128xf32> to vector<8x128xf32>
    %421 = arith.mulf %366, %420 : vector<8x128xf32>
    %422 = vector.broadcast %390 : vector<1x128xf32> to vector<8x128xf32>
    %423 = arith.mulf %422, %421 : vector<8x128xf32>
    %424 = arith.subf %372, %423 : vector<8x128xf32>
    %425 = vector.broadcast %393 : vector<1x128xf32> to vector<8x128xf32>
    %426 = arith.mulf %424, %425 : vector<8x128xf32>
    %c1_i32_158 = arith.constant 1 : i32
    %427 = tpu.dynamic_rotate %421 by %c1_i32_158 dim 0 : vector<8x128xf32>, i32 -> vector<8x128xf32>
    %428 = arith.mulf %421, %427 : vector<8x128xf32>
    %c1_i32_159 = arith.constant 1 : i32
    %429 = tpu.dynamic_rotate %426 by %c1_i32_159 dim 0 : vector<8x128xf32>, i32 -> vector<8x128xf32>
    %430 = arith.mulf %426, %429 : vector<8x128xf32>
    %431 = arith.addf %428, %430 : vector<8x128xf32>
    %432 = math.absf %431 : vector<8x128xf32>
    %cst_160 = arith.constant dense<0.000000e+00> : vector<128xf32>
    %433 = vector.multi_reduction <add>, %432, %cst_160 [0] : vector<8x128xf32> to vector<128xf32>
    %434 = vector.shape_cast %433 : vector<128xf32> to vector<1x128xf32>
    %435 = arith.addf %434, %434 : vector<1x128xf32>
    %436 = arith.addf %349, %435 : vector<1x128xf32>
    %c2_i32_161 = arith.constant 2 : i32
    %437 = tpu.dynamic_rotate %421 by %c2_i32_161 dim 0 : vector<8x128xf32>, i32 -> vector<8x128xf32>
    %438 = arith.mulf %421, %437 : vector<8x128xf32>
    %c2_i32_162 = arith.constant 2 : i32
    %439 = tpu.dynamic_rotate %426 by %c2_i32_162 dim 0 : vector<8x128xf32>, i32 -> vector<8x128xf32>
    %440 = arith.mulf %426, %439 : vector<8x128xf32>
    %441 = arith.addf %438, %440 : vector<8x128xf32>
    %442 = math.absf %441 : vector<8x128xf32>
    %cst_163 = arith.constant dense<0.000000e+00> : vector<128xf32>
    %443 = vector.multi_reduction <add>, %442, %cst_163 [0] : vector<8x128xf32> to vector<128xf32>
    %444 = vector.shape_cast %443 : vector<128xf32> to vector<1x128xf32>
    %445 = arith.addf %444, %444 : vector<1x128xf32>
    %446 = arith.addf %436, %445 : vector<1x128xf32>
    %c3_i32_164 = arith.constant 3 : i32
    %447 = tpu.dynamic_rotate %421 by %c3_i32_164 dim 0 : vector<8x128xf32>, i32 -> vector<8x128xf32>
    %448 = arith.mulf %421, %447 : vector<8x128xf32>
    %c3_i32_165 = arith.constant 3 : i32
    %449 = tpu.dynamic_rotate %426 by %c3_i32_165 dim 0 : vector<8x128xf32>, i32 -> vector<8x128xf32>
    %450 = arith.mulf %426, %449 : vector<8x128xf32>
    %451 = arith.addf %448, %450 : vector<8x128xf32>
    %452 = math.absf %451 : vector<8x128xf32>
    %cst_166 = arith.constant dense<0.000000e+00> : vector<128xf32>
    %453 = vector.multi_reduction <add>, %452, %cst_166 [0] : vector<8x128xf32> to vector<128xf32>
    %454 = vector.shape_cast %453 : vector<128xf32> to vector<1x128xf32>
    %455 = arith.addf %454, %454 : vector<1x128xf32>
    %456 = arith.addf %446, %455 : vector<1x128xf32>
    %c4_i32_167 = arith.constant 4 : i32
    %457 = tpu.dynamic_rotate %421 by %c4_i32_167 dim 0 : vector<8x128xf32>, i32 -> vector<8x128xf32>
    %458 = arith.mulf %421, %457 : vector<8x128xf32>
    %c4_i32_168 = arith.constant 4 : i32
    %459 = tpu.dynamic_rotate %426 by %c4_i32_168 dim 0 : vector<8x128xf32>, i32 -> vector<8x128xf32>
    %460 = arith.mulf %426, %459 : vector<8x128xf32>
    %461 = arith.addf %458, %460 : vector<8x128xf32>
    %462 = math.absf %461 : vector<8x128xf32>
    %cst_169 = arith.constant dense<0.000000e+00> : vector<128xf32>
    %463 = vector.multi_reduction <add>, %462, %cst_169 [0] : vector<8x128xf32> to vector<128xf32>
    %464 = vector.shape_cast %463 : vector<128xf32> to vector<1x128xf32>
    %465 = arith.addf %456, %464 : vector<1x128xf32>
    %466 = arith.maximumf %69, %185 : vector<1x128xf32>
    %467 = arith.maximumf %466, %301 : vector<1x128xf32>
    %468 = arith.maximumf %467, %417 : vector<1x128xf32>
    %469 = arith.subf %69, %468 : vector<1x128xf32>
    %470 = math.exp %469 : vector<1x128xf32>
    %471 = arith.mulf %71, %470 : vector<1x128xf32>
    %472 = arith.subf %185, %468 : vector<1x128xf32>
    %473 = math.exp %472 : vector<1x128xf32>
    %474 = arith.mulf %187, %473 : vector<1x128xf32>
    %475 = arith.addf %471, %474 : vector<1x128xf32>
    %476 = arith.addf %71, %187 : vector<1x128xf32>
    %477 = arith.subf %301, %468 : vector<1x128xf32>
    %478 = math.exp %477 : vector<1x128xf32>
    %479 = arith.mulf %303, %478 : vector<1x128xf32>
    %480 = arith.addf %475, %479 : vector<1x128xf32>
    %481 = arith.addf %476, %303 : vector<1x128xf32>
    %482 = arith.subf %417, %468 : vector<1x128xf32>
    %483 = math.exp %482 : vector<1x128xf32>
    %484 = arith.mulf %419, %483 : vector<1x128xf32>
    %485 = arith.addf %480, %484 : vector<1x128xf32>
    %486 = arith.addf %481, %419 : vector<1x128xf32>
    %487 = math.log %485 : vector<1x128xf32>
    %488 = arith.addf %468, %487 : vector<1x128xf32>
    %489 = math.log %486 : vector<1x128xf32>
    %490 = arith.subf %488, %489 : vector<1x128xf32>
    %491 = tpu.iota {dimensions = array<i32: 1>} : vector<1x128xi32>
    %c128_i32 = arith.constant 128 : i32
    %492 = arith.muli %arg0, %c128_i32 : i32
    %493 = vector.broadcast %492 : i32 to vector<1x128xi32>
    %494 = arith.addi %493, %491 : vector<1x128xi32>
    %c2_i32_170 = arith.constant 2 : i32
    %495 = vector.broadcast %c2_i32_170 : i32 to vector<1x128xi32>
    %496 = arith.cmpi slt, %494, %495 : vector<1x128xi32>
    %cst_171 = arith.constant 0.000000e+00 : f32
    %497 = vector.broadcast %cst_171 : f32 to vector<1x128xf32>
    %498 = arith.select %496, %490, %497 : vector<1x128xi1>, vector<1x128xf32>
    %cst_172 = arith.constant dense<0.000000e+00> : vector<1xf32>
    %499 = vector.multi_reduction <add>, %498, %cst_172 [1] : vector<1x128xf32> to vector<1xf32>
    %500 = vector.shape_cast %499 : vector<1xf32> to vector<1x1xf32>
    %cst_173 = arith.constant 0.000000e+00 : f32
    %501 = vector.broadcast %cst_173 : f32 to vector<1x128xf32>
    %502 = arith.select %496, %465, %501 : vector<1x128xi1>, vector<1x128xf32>
    %cst_174 = arith.constant dense<0.000000e+00> : vector<1xf32>
    %503 = vector.multi_reduction <add>, %502, %cst_174 [1] : vector<1x128xf32> to vector<1xf32>
    %504 = vector.shape_cast %503 : vector<1xf32> to vector<1x1xf32>
    %505 = tpu.iota {dimensions = array<i32: 0>} : vector<8x128xi32>
    %506 = tpu.iota {dimensions = array<i32: 1>} : vector<8x128xi32>
    %c0_i32 = arith.constant 0 : i32
    %507 = vector.broadcast %c0_i32 : i32 to vector<8x128xi32>
    %508 = arith.cmpi eq, %505, %507 : vector<8x128xi32>
    %c0_i32_175 = arith.constant 0 : i32
    %509 = vector.broadcast %c0_i32_175 : i32 to vector<8x128xi32>
    %510 = arith.cmpi eq, %506, %509 : vector<8x128xi32>
    %511 = arith.andi %508, %510 : vector<8x128xi1>
    %cst_176 = arith.constant 0.000000e+00 : f32
    %512 = vector.shape_cast %500 : vector<1x1xf32> to vector<1x1xf32>
    %513 = vector.broadcast %512 : vector<1x1xf32> to vector<8x128xf32>
    %514 = vector.broadcast %cst_176 : f32 to vector<8x128xf32>
    %515 = arith.select %511, %513, %514 : vector<8x128xi1>, vector<8x128xf32>
    %516 = vector.shape_cast %515 : vector<8x128xf32> to vector<1x8x128xf32>
    %c0_177 = arith.constant 0 : index
    %c0_178 = arith.constant 0 : index
    %c0_179 = arith.constant 0 : index
    %517 = vector.load %arg6[%c0_177, %c0_178, %c0_179] : memref<1x8x128xf32, #tpu.memory_space<vmem>>, vector<1x8x128xf32>
    tpu.vector_store %arg6[%c0_177, %c0_178, %c0_179], %516 {strides = array<i32>} : memref<1x8x128xf32, #tpu.memory_space<vmem>>, vector<1x8x128xf32>,
    %cst_180 = arith.constant 0.000000e+00 : f32
    %518 = vector.shape_cast %504 : vector<1x1xf32> to vector<1x1xf32>
    %519 = vector.broadcast %518 : vector<1x1xf32> to vector<8x128xf32>
    %520 = vector.broadcast %cst_180 : f32 to vector<8x128xf32>
    %521 = arith.select %511, %519, %520 : vector<8x128xi1>, vector<8x128xf32>
    %522 = vector.shape_cast %521 : vector<8x128xf32> to vector<1x8x128xf32>
    %c0_181 = arith.constant 0 : index
    %c0_182 = arith.constant 0 : index
    %c0_183 = arith.constant 0 : index
    %523 = vector.load %arg7[%c0_181, %c0_182, %c0_183] : memref<1x8x128xf32, #tpu.memory_space<vmem>>, vector<1x8x128xf32>
    tpu.vector_store %arg7[%c0_181, %c0_182, %c0_183], %522 {strides = array<i32>} : memref<1x8x128xf32, #tpu.memory_space<vmem>>, vector<1x8x128xf32>,
    return
  }
  func.func @transform_0(%arg0: i32) -> (i32, i32, i32) {
    %c0_i32 = arith.constant 0 : i32
    %c0_i32_0 = arith.constant 0 : i32
    %c0_i32_1 = arith.constant 0 : i32
    return %c0_i32, %c0_i32_0, %arg0 : i32, i32, i32
  }
  func.func @transform_1(%arg0: i32) -> (i32, i32, i32) {
    %c0_i32 = arith.constant 0 : i32
    %c0_i32_0 = arith.constant 0 : i32
    %c0_i32_1 = arith.constant 0 : i32
    return %c0_i32, %c0_i32_0, %arg0 : i32, i32, i32
  }
  func.func @transform_2(%arg0: i32) -> (i32, i32, i32) {
    %c0_i32 = arith.constant 0 : i32
    %c0_i32_0 = arith.constant 0 : i32
    %c0_i32_1 = arith.constant 0 : i32
    return %c0_i32, %c0_i32_0, %arg0 : i32, i32, i32
  }
  func.func @transform_3(%arg0: i32) -> (i32, i32, i32, i32) {
    %c0_i32 = arith.constant 0 : i32
    %c0_i32_0 = arith.constant 0 : i32
    %c0_i32_1 = arith.constant 0 : i32
    %c0_i32_2 = arith.constant 0 : i32
    return %c0_i32, %c0_i32_0, %c0_i32_1, %arg0 : i32, i32, i32, i32
  }
  func.func @transform_4(%arg0: i32) -> (i32, i32) {
    %c0_i32 = arith.constant 0 : i32
    %c0_i32_0 = arith.constant 0 : i32
    return %c0_i32, %arg0 : i32, i32
  }
  func.func @transform_5(%arg0: i32) -> (i32, i32, i32) {
    %c0_i32 = arith.constant 0 : i32
    %c0_i32_0 = arith.constant 0 : i32
    %c0_i32_1 = arith.constant 0 : i32
    return %arg0, %c0_i32, %c0_i32_0 : i32, i32, i32
  }
  func.func @transform_6(%arg0: i32) -> (i32, i32, i32) {
    %c0_i32 = arith.constant 0 : i32
    %c0_i32_0 = arith.constant 0 : i32
    %c0_i32_1 = arith.constant 0 : i32
    return %arg0, %c0_i32, %c0_i32_0 : i32, i32, i32
  }
}

</mosaic_0001>

<llo_original>
// kernel: tpu_custom_call.1
$region0: #{tpu_custom_call.1}
  #allocation0 [shape = 'u32[]', space=smem, size = 0x4, offset = 0x4, fixed_abs, tag = 'smem constant byte address 0x4 - core index']
  #allocation1 [shape = 'u32[144,128]{1,0:T(1,128)}', space=vmem, size = 0x12000, scoped, tag = 'internal scratch']
  %s0 = inlined_call_operand.vmem [shape: f32[4,1,2], index: 0, kind: input, shape index: {}]
  %s1 = inlined_call_operand.vmem [shape: f32[4,8,2], index: 1, kind: input, shape index: {}]
  %s2 = inlined_call_operand.vmem [shape: f32[4,8,2], index: 2, kind: input, shape index: {}]
  %s3 = inlined_call_operand.vmem [shape: f32[4,2,8,2], index: 3, kind: input, shape index: {}]
  %s4 = inlined_call_operand.vmem [shape: f32[8,2], index: 4, kind: input, shape index: {}]
  %s5 = inlined_call_operand.hbm [shape: f32[1,8,128], index: 5, kind: output, shape index: {0}]
  %s6 = inlined_call_operand.hbm [shape: f32[1,8,128], index: 6, kind: output, shape index: {1}]
  %7 = xla_tuple %s5, %s6
  %s8 = sld [smem:[#allocation0]]
  $region38: #{tpu_custom_call.1} parent=0
    _
  %s10 = ssub.s32 1, %s8
  %s11 = scalar_select 0, %s10, %s8
  $region1: #{tpu_custom_call.1} parent=0
    #allocation2 [shape = 'u8[4096]{0}', space=vmem, size = 0x1000, scoped, tag = 'output window, operand 0, single buffered']
    #allocation3 [shape = 's32[1]{0}', space=sflag, size = 0x4, scoped, tag = 'scoped memory for tpu_custom_call.1']
    #allocation4 [shape = 'u8[4096]{0}', space=vmem, size = 0x1000, scoped, tag = 'output window, operand 1, single buffered']
    #allocation5 [shape = 's32[1]{0}', space=sflag, size = 0x4, scoped, tag = 'scoped memory for tpu_custom_call.1']
    %12 = vsyncpa [#allocation3], 0
    %13 = vsyncpa [#allocation5], 0
    // Predicated region
    $region2: #{tpu_custom_call.1} parent=1 // pred_check
      _
    $region3: #{tpu_custom_call.1} parent=1 // pred_check_branch
      %15 = sbr.rel (0) target = $region5
    $region4: #{tpu_custom_call.1} parent=1 // pred_region
      _
    $region5: #{tpu_custom_call.1} parent=1 // pred_fallthru
      _
    // Predicated region
    $region6: #{tpu_custom_call.1} parent=1 // pred_check
      _
    $region7: #{tpu_custom_call.1} parent=1 // pred_check_branch
      %17 = sbr.rel (0) target = $region9
    $region8: #{tpu_custom_call.1} parent=1 // pred_region
      _
    $region9: #{tpu_custom_call.1} parent=1 // pred_fallthru
      _
    // Predicated region
    $region10: #{tpu_custom_call.1} parent=1 // pred_check
      _
    $region11: #{tpu_custom_call.1} parent=1 // pred_check_branch
      %19 = sbr.rel (0) target = $region13
    $region12: #{tpu_custom_call.1} parent=1 // pred_region
      _
    $region13: #{tpu_custom_call.1} parent=1 // pred_fallthru
      _
    // Predicated region
    $region14: #{tpu_custom_call.1} parent=1 // pred_check
      _
    $region15: #{tpu_custom_call.1} parent=1 // pred_check_branch
      %21 = sbr.rel (0) target = $region17
    $region16: #{tpu_custom_call.1} parent=1 // pred_region
      _
    $region17: #{tpu_custom_call.1} parent=1 // pred_fallthru
      _
    // Predicated region
    $region18: #{tpu_custom_call.1} parent=1 // pred_check
      _
    $region19: #{tpu_custom_call.1} parent=1 // pred_check_branch
      %23 = sbr.rel (0) target = $region21
    $region20: #{tpu_custom_call.1} parent=1 // pred_region
      _
    $region21: #{tpu_custom_call.1} parent=1 // pred_fallthru
      _
    %v24 = vld [vmem:[%s4] sm:$0xff]
    %v25 = vld [vmem:[%s2] sm:$0xff]
    %v26 = vld [vmem:[%s1] sm:$0xff]
    %v27 = vrcp.pop %v25
    %v28 = vmul.f32 %v25, %v27
    %v29 = vsub.f32 2.0, %v28
    %v30 = vmul.f32 %v27, %v29
    %v31 = vsub.f32 %v24, %v26
    %v32 = vmul.f32 %v31, %v31
    %v33 = vmul.f32 %v32, %v30
    %v34 = vrot.slane %v33, 4
    %v35 = vadd.f32 %v33, %v34
    %v36 = vrot.slane %v35, 2
    %v37 = vadd.f32 %v35, %v36
    %v38 = vrot.slane %v37, 1
    %v39 = vadd.f32 %v37, %v38
    %v40 = vld [vmem:[%s3] sm:$0xff]
    %v41 = vmul.f32 %v40, %v30
    %v42 = vmul.f32 %v41, %v31
    %v43 = vrot.slane %v42, 4
    %v44 = vadd.f32 %v42, %v43
    %v45 = vrot.slane %v44, 2
    %v46 = vadd.f32 %v44, %v45
    %v47 = vrot.slane %v46, 1
    %v48 = vadd.f32 %v46, %v47
    %s49 = scalar_lea.vmem %s3, 8
    %v50 = vld [vmem:[%s49] sm:$0xff]
    %v51 = vmul.f32 %v50, %v30
    %v52 = vmul.f32 %v51, %v31
    %v53 = vrot.slane %v52, 4
    %v54 = vadd.f32 %v52, %v53
    %v55 = vrot.slane %v54, 2
    %v56 = vadd.f32 %v54, %v55
    %v57 = vrot.slane %v56, 1
    %v58 = vadd.f32 %v56, %v57
    %v59 = vmul.f32 %v41, %v40
    %v60 = vrot.slane %v59, 4
    %v61 = vadd.f32 %v59, %v60
    %v62 = vrot.slane %v61, 2
    %v63 = vadd.f32 %v61, %v62
    %v64 = vrot.slane %v63, 1
    %v65 = vadd.f32 %v63, %v64
    %v66 = vadd.f32 %v65, 1.0
    %v67 = vmul.f32 %v51, %v40
    %v68 = vrot.slane %v67, 4
    %v69 = vadd.f32 %v67, %v68
    %v70 = vrot.slane %v69, 2
    %v71 = vadd.f32 %v69, %v70
    %v72 = vrot.slane %v71, 1
    %v73 = vadd.f32 %v71, %v72
    %v74 = vmul.f32 %v51, %v50
    %v75 = vrot.slane %v74, 4
    %v76 = vadd.f32 %v74, %v75
    %v77 = vrot.slane %v76, 2
    %v78 = vadd.f32 %v76, %v77
    %v79 = vrot.slane %v78, 1
    %v80 = vadd.f32 %v78, %v79
    %v81 = vadd.f32 %v80, 1.0
    %v82 = vrsqrt.pop %v66
    %v83 = vmul.f32 %v73, %v82
    %v84 = vmul.f32 %v83, %v83
    %v85 = vsub.f32 %v81, %v84
    %v86 = vrsqrt.pop %v85
    %v87 = vmul.f32 %v66, %v85
    %v88 = vmul.f32 %v48, %v82
    %v89 = vmul.f32 %v83, %v88
    %v90 = vsub.f32 %v58, %v89
    %v91 = vmul.f32 %v90, %v86
    %v92 = vmul.f32 %v88, %v88
    %v93 = vsub.f32 %v39, %v92
    %v94 = vmul.f32 %v91, %v91
    %v95 = vsub.f32 %v93, %v94
    %v96 = vrot.slane %v25, 7
    %v97 = vmul.f32 %v25, %v96
    %v98 = vrot.slane %v97, 6
    %v99 = vmul.f32 %v97, %v98
    %v100 = vrot.slane %v99, 4
    %v101 = vmul.f32 %v99, %v100
    %v102 = vrot.slane %v101, 4
    %v103 = vmax.f32 %v101, %v102
    %v104 = vrot.slane %v103, 2
    %v105 = vmax.f32 %v103, %v104
    %v106 = vrot.slane %v105, 1
    %v107 = vmax.f32 %v105, %v106
    %v108 = vmul.f32 %v107, %v87
    %v109 = vlog2.pop %v108
    %v110 = vmul.f32 %v109, 0.6931472
    %v111 = vadd.f32 %v110, 14.703016
    %v112 = vadd.f32 %v111, %v95
    %v113 = vmul.f32 %v112, -0.5
    %v114 = vld [vmem:[%s0] sm:$0x1]
    %v115 = vmul.f32 %v41, %v82
    %v116 = vmul.f32 %v83, %v115
    %v117 = vsub.f32 %v51, %v116
    %v118 = vmul.f32 %v117, %v86
    %v119 = vrot.slane %v115, 7
    %v120 = vmul.f32 %v115, %v119
    %v121 = vrot.slane %v118, 7
    %v122 = vmul.f32 %v118, %v121
    %v123 = vadd.f32 %v120, %v122
    %v124 = vand.u32 2147483647, %v123
    %v125 = vrot.slane %v124, 4
    %v126 = vadd.f32 %v124, %v125
    %v127 = vrot.slane %v126, 2
    %v128 = vadd.f32 %v126, %v127
    %v129 = vrot.slane %v128, 1
    %v130 = vadd.f32 %v128, %v129
    %v131 = vadd.f32 %v130, %v130
    %v132 = vadd.f32 %v131, 0.0
    %v133 = vrot.slane %v115, 6
    %v134 = vmul.f32 %v115, %v133
    %v135 = vrot.slane %v118, 6
    %v136 = vmul.f32 %v118, %v135
    %v137 = vadd.f32 %v134, %v136
    %v138 = vand.u32 2147483647, %v137
    %v139 = vrot.slane %v138, 4
    %v140 = vadd.f32 %v138, %v139
    %v141 = vrot.slane %v140, 2
    %v142 = vadd.f32 %v140, %v141
    %v143 = vrot.slane %v142, 1
    %v144 = vadd.f32 %v142, %v143
    %v145 = vadd.f32 %v144, %v144
    %v146 = vadd.f32 %v132, %v145
    %v147 = vrot.slane %v115, 5
    %v148 = vmul.f32 %v115, %v147
    %v149 = vrot.slane %v118, 5
    %v150 = vmul.f32 %v118, %v149
    %v151 = vadd.f32 %v148, %v150
    %v152 = vand.u32 2147483647, %v151
    %v153 = vrot.slane %v152, 4
    %v154 = vadd.f32 %v152, %v153
    %v155 = vrot.slane %v154, 2
    %v156 = vadd.f32 %v154, %v155
    %v157 = vrot.slane %v156, 1
    %v158 = vadd.f32 %v156, %v157
    %v159 = vadd.f32 %v158, %v158
    %v160 = vadd.f32 %v146, %v159
    %v161 = vrot.slane %v115, 4
    %v162 = vmul.f32 %v115, %v161
    %v163 = vrot.slane %v118, 4
    %v164 = vmul.f32 %v118, %v163
    %v165 = vadd.f32 %v162, %v164
    %v166 = vand.u32 2147483647, %v165
    %v167 = vrot.slane %v166, 4
    %v168 = vadd.f32 %v166, %v167
    %v169 = vrot.slane %v168, 2
    %v170 = vadd.f32 %v168, %v169
    %v171 = vrot.slane %v170, 1
    %v172 = vadd.f32 %v170, %v171
    %v173 = vadd.f32 %v160, %v172
    %s174 = scalar_lea.vmem %s2, 8
    %v175 = vld [vmem:[%s174] sm:$0xff]
    %s176 = scalar_lea.vmem %s1, 8
    %v177 = vld [vmem:[%s176] sm:$0xff]
    %v178 = vrcp.pop %v175
    %v179 = vmul.f32 %v175, %v178
    %v180 = vsub.f32 2.0, %v179
    %v181 = vmul.f32 %v178, %v180
    %v182 = vsub.f32 %v24, %v177
    %v183 = vmul.f32 %v182, %v182
    %v184 = vmul.f32 %v183, %v181
    %v185 = vrot.slane %v184, 4
    %v186 = vadd.f32 %v184, %v185
    %v187 = vrot.slane %v186, 2
    %v188 = vadd.f32 %v186, %v187
    %v189 = vrot.slane %v188, 1
    %v190 = vadd.f32 %v188, %v189
    %s191 = scalar_lea.vmem %s3, 16
    %v192 = vld [vmem:[%s191] sm:$0xff]
    %v193 = vmul.f32 %v192, %v181
    %v194 = vmul.f32 %v193, %v182
    %v195 = vrot.slane %v194, 4
    %v196 = vadd.f32 %v194, %v195
    %v197 = vrot.slane %v196, 2
    %v198 = vadd.f32 %v196, %v197
    %v199 = vrot.slane %v198, 1
    %v200 = vadd.f32 %v198, %v199
    %s201 = scalar_lea.vmem %s3, 24
    %v202 = vld [vmem:[%s201] sm:$0xff]
    %v203 = vmul.f32 %v202, %v181
    %v204 = vmul.f32 %v203, %v182
    %v205 = vrot.slane %v204, 4
    %v206 = vadd.f32 %v204, %v205
    %v207 = vrot.slane %v206, 2
    %v208 = vadd.f32 %v206, %v207
    %v209 = vrot.slane %v208, 1
    %v210 = vadd.f32 %v208, %v209
    %v211 = vmul.f32 %v193, %v192
    %v212 = vrot.slane %v211, 4
    %v213 = vadd.f32 %v211, %v212
    %v214 = vrot.slane %v213, 2
    %v215 = vadd.f32 %v213, %v214
    %v216 = vrot.slane %v215, 1
    %v217 = vadd.f32 %v215, %v216
    %v218 = vadd.f32 %v217, 1.0
    %v219 = vmul.f32 %v203, %v192
    %v220 = vrot.slane %v219, 4
    %v221 = vadd.f32 %v219, %v220
    %v222 = vrot.slane %v221, 2
    %v223 = vadd.f32 %v221, %v222
    %v224 = vrot.slane %v223, 1
    %v225 = vadd.f32 %v223, %v224
    %v226 = vmul.f32 %v203, %v202
    %v227 = vrot.slane %v226, 4
    %v228 = vadd.f32 %v226, %v227
    %v229 = vrot.slane %v228, 2
    %v230 = vadd.f32 %v228, %v229
    %v231 = vrot.slane %v230, 1
    %v232 = vadd.f32 %v230, %v231
    %v233 = vadd.f32 %v232, 1.0
    %v234 = vrsqrt.pop %v218
    %v235 = vmul.f32 %v225, %v234
    %v236 = vmul.f32 %v235, %v235
    %v237 = vsub.f32 %v233, %v236
    %v238 = vrsqrt.pop %v237
    %v239 = vmul.f32 %v218, %v237
    %v240 = vmul.f32 %v200, %v234
    %v241 = vmul.f32 %v235, %v240
    %v242 = vsub.f32 %v210, %v241
    %v243 = vmul.f32 %v242, %v238
    %v244 = vmul.f32 %v240, %v240
    %v245 = vsub.f32 %v190, %v244
    %v246 = vmul.f32 %v243, %v243
    %v247 = vsub.f32 %v245, %v246
    %v248 = vrot.slane %v175, 7
    %v249 = vmul.f32 %v175, %v248
    %v250 = vrot.slane %v249, 6
    %v251 = vmul.f32 %v249, %v250
    %v252 = vrot.slane %v251, 4
    %v253 = vmul.f32 %v251, %v252
    %v254 = vrot.slane %v253, 4
    %v255 = vmax.f32 %v253, %v254
    %v256 = vrot.slane %v255, 2
    %v257 = vmax.f32 %v255, %v256
    %v258 = vrot.slane %v257, 1
    %v259 = vmax.f32 %v257, %v258
    %v260 = vmul.f32 %v259, %v239
    %v261 = vlog2.pop %v260
    %v262 = vmul.f32 %v261, 0.6931472
    %v263 = vadd.f32 %v262, 14.703016
    %v264 = vadd.f32 %v263, %v247
    %v265 = vmul.f32 %v264, -0.5
    %s266 = scalar_lea.vmem %s0, 1
    %v267 = vld [vmem:[%s266] sm:$0x1]
    %v268 = vmul.f32 %v193, %v234
    %v269 = vmul.f32 %v235, %v268
    %v270 = vsub.f32 %v203, %v269
    %v271 = vmul.f32 %v270, %v238
    %v272 = vrot.slane %v268, 7
    %v273 = vmul.f32 %v268, %v272
    %v274 = vrot.slane %v271, 7
    %v275 = vmul.f32 %v271, %v274
    %v276 = vadd.f32 %v273, %v275
    %v277 = vand.u32 2147483647, %v276
    %v278 = vrot.slane %v277, 4
    %v279 = vadd.f32 %v277, %v278
    %v280 = vrot.slane %v279, 2
    %v281 = vadd.f32 %v279, %v280
    %v282 = vrot.slane %v281, 1
    %v283 = vadd.f32 %v281, %v282
    %v284 = vadd.f32 %v283, %v283
    %v285 = vadd.f32 %v173, %v284
    %v286 = vrot.slane %v268, 6
    %v287 = vmul.f32 %v268, %v286
    %v288 = vrot.slane %v271, 6
    %v289 = vmul.f32 %v271, %v288
    %v290 = vadd.f32 %v287, %v289
    %v291 = vand.u32 2147483647, %v290
    %v292 = vrot.slane %v291, 4
    %v293 = vadd.f32 %v291, %v292
    %v294 = vrot.slane %v293, 2
    %v295 = vadd.f32 %v293, %v294
    %v296 = vrot.slane %v295, 1
    %v297 = vadd.f32 %v295, %v296
    %v298 = vadd.f32 %v297, %v297
    %v299 = vadd.f32 %v285, %v298
    %v300 = vrot.slane %v268, 5
    %v301 = vmul.f32 %v268, %v300
    %v302 = vrot.slane %v271, 5
    %v303 = vmul.f32 %v271, %v302
    %v304 = vadd.f32 %v301, %v303
    %v305 = vand.u32 2147483647, %v304
    %v306 = vrot.slane %v305, 4
    %v307 = vadd.f32 %v305, %v306
    %v308 = vrot.slane %v307, 2
    %v309 = vadd.f32 %v307, %v308
    %v310 = vrot.slane %v309, 1
    %v311 = vadd.f32 %v309, %v310
    %v312 = vadd.f32 %v311, %v311
    %v313 = vadd.f32 %v299, %v312
    %v314 = vrot.slane %v268, 4
    %v315 = vmul.f32 %v268, %v314
    %v316 = vrot.slane %v271, 4
    %v317 = vmul.f32 %v271, %v316
    %v318 = vadd.f32 %v315, %v317
    %v319 = vand.u32 2147483647, %v318
    %v320 = vrot.slane %v319, 4
    %v321 = vadd.f32 %v319, %v320
    %v322 = vrot.slane %v321, 2
    %v323 = vadd.f32 %v321, %v322
    %v324 = vrot.slane %v323, 1
    %v325 = vadd.f32 %v323, %v324
    %v326 = vadd.f32 %v313, %v325
    %s327 = scalar_lea.vmem %s2, 16
    %v328 = vld [vmem:[%s327] sm:$0xff]
    %s329 = scalar_lea.vmem %s1, 16
    %v330 = vld [vmem:[%s329] sm:$0xff]
    %v331 = vrcp.pop %v328
    %v332 = vmul.f32 %v328, %v331
    %v333 = vsub.f32 2.0, %v332
    %v334 = vmul.f32 %v331, %v333
    %v335 = vsub.f32 %v24, %v330
    %v336 = vmul.f32 %v335, %v335
    %v337 = vmul.f32 %v336, %v334
    %v338 = vrot.slane %v337, 4
    %v339 = vadd.f32 %v337, %v338
    %v340 = vrot.slane %v339, 2
    %v341 = vadd.f32 %v339, %v340
    %v342 = vrot.slane %v341, 1
    %v343 = vadd.f32 %v341, %v342
    %s344 = scalar_lea.vmem %s3, 32
    %v345 = vld [vmem:[%s344] sm:$0xff]
    %v346 = vmul.f32 %v345, %v334
    %v347 = vmul.f32 %v346, %v335
    %v348 = vrot.slane %v347, 4
    %v349 = vadd.f32 %v347, %v348
    %v350 = vrot.slane %v349, 2
    %v351 = vadd.f32 %v349, %v350
    %v352 = vrot.slane %v351, 1
    %v353 = vadd.f32 %v351, %v352
    %s354 = scalar_lea.vmem %s3, 40
    %v355 = vld [vmem:[%s354] sm:$0xff]
    %v356 = vmul.f32 %v355, %v334
    %v357 = vmul.f32 %v356, %v335
    %v358 = vrot.slane %v357, 4
    %v359 = vadd.f32 %v357, %v358
    %v360 = vrot.slane %v359, 2
    %v361 = vadd.f32 %v359, %v360
    %v362 = vrot.slane %v361, 1
    %v363 = vadd.f32 %v361, %v362
    %v364 = vmul.f32 %v346, %v345
    %v365 = vrot.slane %v364, 4
    %v366 = vadd.f32 %v364, %v365
    %v367 = vrot.slane %v366, 2
    %v368 = vadd.f32 %v366, %v367
    %v369 = vrot.slane %v368, 1
    %v370 = vadd.f32 %v368, %v369
    %v371 = vadd.f32 %v370, 1.0
    %v372 = vmul.f32 %v356, %v345
    %v373 = vrot.slane %v372, 4
    %v374 = vadd.f32 %v372, %v373
    %v375 = vrot.slane %v374, 2
    %v376 = vadd.f32 %v374, %v375
    %v377 = vrot.slane %v376, 1
    %v378 = vadd.f32 %v376, %v377
    %v379 = vmul.f32 %v356, %v355
    %v380 = vrot.slane %v379, 4
    %v381 = vadd.f32 %v379, %v380
    %v382 = vrot.slane %v381, 2
    %v383 = vadd.f32 %v381, %v382
    %v384 = vrot.slane %v383, 1
    %v385 = vadd.f32 %v383, %v384
    %v386 = vadd.f32 %v385, 1.0
    %v387 = vrsqrt.pop %v371
    %v388 = vmul.f32 %v378, %v387
    %v389 = vmul.f32 %v388, %v388
    %v390 = vsub.f32 %v386, %v389
    %v391 = vrsqrt.pop %v390
    %v392 = vmul.f32 %v371, %v390
    %v393 = vmul.f32 %v353, %v387
    %v394 = vmul.f32 %v388, %v393
    %v395 = vsub.f32 %v363, %v394
    %v396 = vmul.f32 %v395, %v391
    %v397 = vmul.f32 %v393, %v393
    %v398 = vsub.f32 %v343, %v397
    %v399 = vmul.f32 %v396, %v396
    %v400 = vsub.f32 %v398, %v399
    %v401 = vrot.slane %v328, 7
    %v402 = vmul.f32 %v328, %v401
    %v403 = vrot.slane %v402, 6
    %v404 = vmul.f32 %v402, %v403
    %v405 = vrot.slane %v404, 4
    %v406 = vmul.f32 %v404, %v405
    %v407 = vrot.slane %v406, 4
    %v408 = vmax.f32 %v406, %v407
    %v409 = vrot.slane %v408, 2
    %v410 = vmax.f32 %v408, %v409
    %v411 = vrot.slane %v410, 1
    %v412 = vmax.f32 %v410, %v411
    %v413 = vmul.f32 %v412, %v392
    %v414 = vlog2.pop %v413
    %v415 = vmul.f32 %v414, 0.6931472
    %v416 = vadd.f32 %v415, 14.703016
    %v417 = vadd.f32 %v416, %v400
    %v418 = vmul.f32 %v417, -0.5
    %s419 = scalar_lea.vmem %s0, 2
    %v420 = vld [vmem:[%s419] sm:$0x1]
    %v421 = vmul.f32 %v346, %v387
    %v422 = vmul.f32 %v388, %v421
    %v423 = vsub.f32 %v356, %v422
    %v424 = vmul.f32 %v423, %v391
    %v425 = vrot.slane %v421, 7
    %v426 = vmul.f32 %v421, %v425
    %v427 = vrot.slane %v424, 7
    %v428 = vmul.f32 %v424, %v427
    %v429 = vadd.f32 %v426, %v428
    %v430 = vand.u32 2147483647, %v429
    %v431 = vrot.slane %v430, 4
    %v432 = vadd.f32 %v430, %v431
    %v433 = vrot.slane %v432, 2
    %v434 = vadd.f32 %v432, %v433
    %v435 = vrot.slane %v434, 1
    %v436 = vadd.f32 %v434, %v435
    %v437 = vadd.f32 %v436, %v436
    %v438 = vadd.f32 %v326, %v437
    %v439 = vrot.slane %v421, 6
    %v440 = vmul.f32 %v421, %v439
    %v441 = vrot.slane %v424, 6
    %v442 = vmul.f32 %v424, %v441
    %v443 = vadd.f32 %v440, %v442
    %v444 = vand.u32 2147483647, %v443
    %v445 = vrot.slane %v444, 4
    %v446 = vadd.f32 %v444, %v445
    %v447 = vrot.slane %v446, 2
    %v448 = vadd.f32 %v446, %v447
    %v449 = vrot.slane %v448, 1
    %v450 = vadd.f32 %v448, %v449
    %v451 = vadd.f32 %v450, %v450
    %v452 = vadd.f32 %v438, %v451
    %v453 = vrot.slane %v421, 5
    %v454 = vmul.f32 %v421, %v453
    %v455 = vrot.slane %v424, 5
    %v456 = vmul.f32 %v424, %v455
    %v457 = vadd.f32 %v454, %v456
    %v458 = vand.u32 2147483647, %v457
    %v459 = vrot.slane %v458, 4
    %v460 = vadd.f32 %v458, %v459
    %v461 = vrot.slane %v460, 2
    %v462 = vadd.f32 %v460, %v461
    %v463 = vrot.slane %v462, 1
    %v464 = vadd.f32 %v462, %v463
    %v465 = vadd.f32 %v464, %v464
    %v466 = vadd.f32 %v452, %v465
    %v467 = vrot.slane %v421, 4
    %v468 = vmul.f32 %v421, %v467
    %v469 = vrot.slane %v424, 4
    %v470 = vmul.f32 %v424, %v469
    %v471 = vadd.f32 %v468, %v470
    %v472 = vand.u32 2147483647, %v471
    %v473 = vrot.slane %v472, 4
    %v474 = vadd.f32 %v472, %v473
    %v475 = vrot.slane %v474, 2
    %v476 = vadd.f32 %v474, %v475
    %v477 = vrot.slane %v476, 1
    %v478 = vadd.f32 %v476, %v477
    %v479 = vadd.f32 %v466, %v478
    %s480 = scalar_lea.vmem %s2, 24
    %v481 = vld [vmem:[%s480] sm:$0xff]
    %s482 = scalar_lea.vmem %s1, 24
    %v483 = vld [vmem:[%s482] sm:$0xff]
    %v484 = vrcp.pop %v481
    %v485 = vmul.f32 %v481, %v484
    %v486 = vsub.f32 2.0, %v485
    %v487 = vmul.f32 %v484, %v486
    %v488 = vsub.f32 %v24, %v483
    %v489 = vmul.f32 %v488, %v488
    %v490 = vmul.f32 %v489, %v487
    %v491 = vrot.slane %v490, 4
    %v492 = vadd.f32 %v490, %v491
    %v493 = vrot.slane %v492, 2
    %v494 = vadd.f32 %v492, %v493
    %v495 = vrot.slane %v494, 1
    %v496 = vadd.f32 %v494, %v495
    %s497 = scalar_lea.vmem %s3, 48
    %v498 = vld [vmem:[%s497] sm:$0xff]
    %v499 = vmul.f32 %v498, %v487
    %v500 = vmul.f32 %v499, %v488
    %v501 = vrot.slane %v500, 4
    %v502 = vadd.f32 %v500, %v501
    %v503 = vrot.slane %v502, 2
    %v504 = vadd.f32 %v502, %v503
    %v505 = vrot.slane %v504, 1
    %v506 = vadd.f32 %v504, %v505
    %s507 = scalar_lea.vmem %s3, 56
    %v508 = vld [vmem:[%s507] sm:$0xff]
    %v509 = vmul.f32 %v508, %v487
    %v510 = vmul.f32 %v509, %v488
    %v511 = vrot.slane %v510, 4
    %v512 = vadd.f32 %v510, %v511
    %v513 = vrot.slane %v512, 2
    %v514 = vadd.f32 %v512, %v513
    %v515 = vrot.slane %v514, 1
    %v516 = vadd.f32 %v514, %v515
    %v517 = vmul.f32 %v499, %v498
    %v518 = vrot.slane %v517, 4
    %v519 = vadd.f32 %v517, %v518
    %v520 = vrot.slane %v519, 2
    %v521 = vadd.f32 %v519, %v520
    %v522 = vrot.slane %v521, 1
    %v523 = vadd.f32 %v521, %v522
    %v524 = vadd.f32 %v523, 1.0
    %v525 = vmul.f32 %v509, %v498
    %v526 = vrot.slane %v525, 4
    %v527 = vadd.f32 %v525, %v526
    %v528 = vrot.slane %v527, 2
    %v529 = vadd.f32 %v527, %v528
    %v530 = vrot.slane %v529, 1
    %v531 = vadd.f32 %v529, %v530
    %v532 = vmul.f32 %v509, %v508
    %v533 = vrot.slane %v532, 4
    %v534 = vadd.f32 %v532, %v533
    %v535 = vrot.slane %v534, 2
    %v536 = vadd.f32 %v534, %v535
    %v537 = vrot.slane %v536, 1
    %v538 = vadd.f32 %v536, %v537
    %v539 = vadd.f32 %v538, 1.0
    %v540 = vrsqrt.pop %v524
    %v541 = vmul.f32 %v531, %v540
    %v542 = vmul.f32 %v541, %v541
    %v543 = vsub.f32 %v539, %v542
    %v544 = vrsqrt.pop %v543
    %v545 = vmul.f32 %v524, %v543
    %v546 = vmul.f32 %v506, %v540
    %v547 = vmul.f32 %v541, %v546
    %v548 = vsub.f32 %v516, %v547
    %v549 = vmul.f32 %v548, %v544
    %v550 = vmul.f32 %v546, %v546
    %v551 = vsub.f32 %v496, %v550
    %v552 = vmul.f32 %v549, %v549
    %v553 = vsub.f32 %v551, %v552
    %v554 = vrot.slane %v481, 7
    %v555 = vmul.f32 %v481, %v554
    %v556 = vrot.slane %v555, 6
    %v557 = vmul.f32 %v555, %v556
    %v558 = vrot.slane %v557, 4
    %v559 = vmul.f32 %v557, %v558
    %v560 = vrot.slane %v559, 4
    %v561 = vmax.f32 %v559, %v560
    %v562 = vrot.slane %v561, 2
    %v563 = vmax.f32 %v561, %v562
    %v564 = vrot.slane %v563, 1
    %v565 = vmax.f32 %v563, %v564
    %v566 = vmul.f32 %v565, %v545
    %v567 = vlog2.pop %v566
    %v568 = vmul.f32 %v567, 0.6931472
    %v569 = vadd.f32 %v568, 14.703016
    %v570 = vadd.f32 %v569, %v553
    %v571 = vmul.f32 %v570, -0.5
    %s572 = scalar_lea.vmem %s0, 3
    %v573 = vld [vmem:[%s572] sm:$0x1]
    %v574 = vmul.f32 %v499, %v540
    %v575 = vmul.f32 %v541, %v574
    %v576 = vsub.f32 %v509, %v575
    %v577 = vmul.f32 %v576, %v544
    %v578 = vrot.slane %v574, 7
    %v579 = vmul.f32 %v574, %v578
    %v580 = vrot.slane %v577, 7
    %v581 = vmul.f32 %v577, %v580
    %v582 = vadd.f32 %v579, %v581
    %v583 = vand.u32 2147483647, %v582
    %v584 = vrot.slane %v583, 4
    %v585 = vadd.f32 %v583, %v584
    %v586 = vrot.slane %v585, 2
    %v587 = vadd.f32 %v585, %v586
    %v588 = vrot.slane %v587, 1
    %v589 = vadd.f32 %v587, %v588
    %v590 = vadd.f32 %v589, %v589
    %v591 = vadd.f32 %v479, %v590
    %v592 = vrot.slane %v574, 6
    %v593 = vmul.f32 %v574, %v592
    %v594 = vrot.slane %v577, 6
    %v595 = vmul.f32 %v577, %v594
    %v596 = vadd.f32 %v593, %v595
    %v597 = vand.u32 2147483647, %v596
    %v598 = vrot.slane %v597, 4
    %v599 = vadd.f32 %v597, %v598
    %v600 = vrot.slane %v599, 2
    %v601 = vadd.f32 %v599, %v600
    %v602 = vrot.slane %v601, 1
    %v603 = vadd.f32 %v601, %v602
    %v604 = vadd.f32 %v603, %v603
    %v605 = vadd.f32 %v591, %v604
    %v606 = vrot.slane %v574, 5
    %v607 = vmul.f32 %v574, %v606
    %v608 = vrot.slane %v577, 5
    %v609 = vmul.f32 %v577, %v608
    %v610 = vadd.f32 %v607, %v609
    %v611 = vand.u32 2147483647, %v610
    %v612 = vrot.slane %v611, 4
    %v613 = vadd.f32 %v611, %v612
    %v614 = vrot.slane %v613, 2
    %v615 = vadd.f32 %v613, %v614
    %v616 = vrot.slane %v615, 1
    %v617 = vadd.f32 %v615, %v616
    %v618 = vadd.f32 %v617, %v617
    %v619 = vadd.f32 %v605, %v618
    %v620 = vrot.slane %v574, 4
    %v621 = vmul.f32 %v574, %v620
    %v622 = vrot.slane %v577, 4
    %v623 = vmul.f32 %v577, %v622
    %v624 = vadd.f32 %v621, %v623
    %v625 = vand.u32 2147483647, %v624
    %v626 = vrot.slane %v625, 4
    %v627 = vadd.f32 %v625, %v626
    %v628 = vrot.slane %v627, 2
    %v629 = vadd.f32 %v627, %v628
    %v630 = vrot.slane %v629, 1
    %v631 = vadd.f32 %v629, %v630
    %v632 = vadd.f32 %v619, %v631
    %v633 = vmax.f32 %v113, %v265
    %v634 = vmax.f32 %v633, %v418
    %v635 = vmax.f32 %v634, %v571
    %v636 = vsub.f32 %v113, %v635
    %v637 = vmul.f32 %v636, 1.442695
    %v638 = vpow.pop %v637
    %v639 = vmul.f32 %v114, %v638
    %v640 = vsub.f32 %v265, %v635
    %v641 = vmul.f32 %v640, 1.442695
    %v642 = vpow.pop %v641
    %v643 = vmul.f32 %v267, %v642
    %v644 = vadd.f32 %v639, %v643
    %v645 = vadd.f32 %v114, %v267
    %v646 = vsub.f32 %v418, %v635
    %v647 = vmul.f32 %v646, 1.442695
    %v648 = vpow.pop %v647
    %v649 = vmul.f32 %v420, %v648
    %v650 = vadd.f32 %v644, %v649
    %v651 = vadd.f32 %v645, %v420
    %v652 = vsub.f32 %v571, %v635
    %v653 = vmul.f32 %v652, 1.442695
    %v654 = vpow.pop %v653
    %v655 = vmul.f32 %v573, %v654
    %v656 = vadd.f32 %v650, %v655
    %v657 = vadd.f32 %v651, %v573
    %v658 = vlog2.pop %v656
    %v659 = vmul.f32 %v658, 0.6931472
    %v660 = vadd.f32 %v635, %v659
    %v661 = vlog2.pop %v657
    %v662 = vmul.f32 %v661, 0.6931472
    %v663 = vsub.f32 %v660, %v662
    %v664 = vlaneseq
    %v665 = vand.u32 %v664, 127
    %s666 = smul.u32 0, 128
    %v667 = vstv %s666
    %v668 = vadd.s32 %v667, %v665
    %vm669 = vcmp.lt.s32.totalorder %v668, 2
    %v670 = vsel %vm669, %v663, 0.0
    %vm671 = vcmask 1040384
    %v672 = vsel %vm671, %v670, 0.0
    %673 = vadd.xlane.f32.xlu0 %v672
    %v674 = vpop.xlane.xlu0 %673
    %v675 = vsel %vm669, %v632, 0.0
    %676 = vadd.xlane.f32.xlu0 %v675
    %v677 = vpop.xlane.xlu0 %676
    %v678 = vlaneseq
    %v679 = vshrl.u32 %v678, 7
    %vm680 = vcmp.eq.s32.totalorder %v679, 0
    %vm681 = vcmp.eq.s32.totalorder %v665, 0
    %vm682 = vmand %vm680, %vm681
    %v683 = vlaneseq
    %v684 = vshrl.u32 %v683, 7
    %v685 = vsub.s32 0, %v684
    %v686 = vrot.slane %v674, %v685
    %v687 = vsel %vm682, %v686, 0.0
    %688 = vst [vmem:[#allocation2] sm:$0xff] %v687
    %v689 = vsel %vm682, %v677, 0.0
    %690 = vst [vmem:[#allocation4] sm:$0xff] %v689
    // Predicated region
    $region22: #{tpu_custom_call.1} parent=1 // pred_check
      _
    $region23: #{tpu_custom_call.1} parent=1 // pred_check_branch
      %692 = sbr.rel (0) target = $region25
    $region24: #{tpu_custom_call.1} parent=1 // pred_region
      %s694 = ssub.s32 128, 128
      %695 = vsyncadd [#allocation3], %s694
      %s697 = sshll.u32 [#allocation2], 4
      %s698 = int_to_ptr.vmem [resolvable:$true] %s697
      %700 = dma.vmem_to_hbm [thread:$0]  %s698, 128, %s5, [#allocation3]
    $region25: #{tpu_custom_call.1} parent=1 // pred_fallthru
      _
    // Predicated region
    $region26: #{tpu_custom_call.1} parent=1 // pred_check
      _
    $region27: #{tpu_custom_call.1} parent=1 // pred_check_branch
      %702 = sbr.rel (0) target = $region29
    $region28: #{tpu_custom_call.1} parent=1 // pred_region
      %s704 = ssub.s32 128, 128
      %705 = vsyncadd [#allocation5], %s704
      %s707 = sshll.u32 [#allocation4], 4
      %s708 = int_to_ptr.vmem [resolvable:$true] %s707
      %710 = dma.vmem_to_hbm [thread:$0]  %s708, 128, %s6, [#allocation5]
    $region29: #{tpu_custom_call.1} parent=1 // pred_fallthru
      _
    // Predicated region
    $region30: #{tpu_custom_call.1} parent=1 // pred_check
      _
    $region31: #{tpu_custom_call.1} parent=1 // pred_check_branch
      %712 = sbr.rel (0) target = $region33
    $region32: #{tpu_custom_call.1} parent=1 // pred_region
      %713 = dma.done [#allocation3], 128
    $region33: #{tpu_custom_call.1} parent=1 // pred_fallthru
      _
    // Predicated region
    $region34: #{tpu_custom_call.1} parent=1 // pred_check
      _
    $region35: #{tpu_custom_call.1} parent=1 // pred_check_branch
      %715 = sbr.rel (0) target = $region37
    $region36: #{tpu_custom_call.1} parent=1 // pred_region
      %716 = dma.done [#allocation5], 128
    $region37: #{tpu_custom_call.1} parent=1 // pred_fallthru
      _
    %717 = vsyncpa [#allocation3], 1
    %718 = vsyncpa [#allocation5], 1

</llo_original>
